<compile_context>
chip_gen: v6e
topology: v6e:2x2x1
jax: 0.10.0
libtpu: 0.0.40
codegen_flags: <defaults>
</compile_context>

<pallas_src>
import functools
import math

import jax
import jax.numpy as jnp
from jax.experimental import pallas as pl
from jax.experimental.pallas import tpu as pltpu


# ----------------------------------------------------------------------------
# Config (deterministic, in-script)
# ----------------------------------------------------------------------------

NUM_CLASSES = 4
CHANS = 32
OUT_STRIDE = 4
TOPK = 10
HEAD_PAD = 128                 # lane-dense fused head output width (only 8 lanes used)
TILE_M = 512                   # row tile for the backbone conv matmuls
TILE_H_HEAD = 16               # output-row tile for the fused head kernel
VMEM_LIMIT = 32 * 1024 * 1024  # safe on v5e/v6e/v7x, raises v5e's 16 MiB default
PIXEL_MEAN = jnp.array([103.53, 116.28, 123.675], jnp.float32)   # BGR, detectron2 default
PIXEL_STD = jnp.array([57.375, 57.12, 58.395], jnp.float32)


# ----------------------------------------------------------------------------
# Pallas kernels
# ----------------------------------------------------------------------------

def _matmul_bias_relu_kernel(x_ref, w_ref, b_ref, o_ref):
    # x: (TILE_M, K) bf16   w: (K, N) bf16   b: (1, N) f32
    acc = jnp.dot(x_ref[...], w_ref[...], preferred_element_type=jnp.float32)
    acc = jnp.maximum(acc + b_ref[...], 0.0)
    o_ref[...] = acc.astype(o_ref.dtype)


def matmul_bias_relu(x, w, b, out_dtype=jnp.bfloat16, tile_m=TILE_M):
    """Row-tiled (M-grid) matmul + bias + ReLU. Weights stay resident, x/out are
    double-buffered across the parallel M grid axis."""
    M, K = x.shape
    Kw, Nc = w.shape
    assert K == Kw
    tm = min(tile_m, M)
    cost = pl.CostEstimate(
        flops=2 * M * K * Nc,
        transcendentals=0,
        bytes_accessed=int(x.size * x.dtype.itemsize + w.size * w.dtype.itemsize
                           + b.size * 4 + M * Nc * 2))
    return pl.pallas_call(
        _matmul_bias_relu_kernel,
        out_shape=jax.ShapeDtypeStruct((M, Nc), out_dtype),
        grid=(pl.cdiv(M, tm),),
        in_specs=[pl.BlockSpec((tm, K), lambda i: (i, 0)),
                  pl.BlockSpec((K, Nc), lambda i: (0, 0)),
                  pl.BlockSpec((1, Nc), lambda i: (0, 0))],
        out_specs=pl.BlockSpec((tm, Nc), lambda i: (i, 0)),
        compiler_params=pltpu.CompilerParams(
            dimension_semantics=("parallel",),
            vmem_limit_bytes=VMEM_LIMIT),
        cost_estimate=cost,
    )(x, w, b.reshape(1, Nc))


def _fused_heads_kernel(x_ref, w1_ref, b1_ref, w2_ref, b2_ref, mask_ref, o_ref,
                        *, m, wp, cin, k_hm):
    # x_ref   : (L, cin)          flattened padded-feature row tile (bf16)
    # w1_ref  : (9*cin, 3*CHANS)  fused 3x3 head-conv weights (hm|wh|reg, tap-major rows)
    # w2_ref  : (3*CHANS, 128)    block-diagonal fused 1x1 head weights, zero-padded lanes
    # mask_ref: (m, 1)            1.0 on valid output columns, 0.0 on the 2 junk cols/row
    # o_ref   : (m, 128)          m = TILE_H * (Wo + 2); junk cols are zeroed in-kernel
    # 3x3 conv as 9 shifted matmuls accumulated in registers (no im2col in HBM).
    acc = None
    for dy in range(3):
        for dx in range(3):
            tap = dy * 3 + dx
            win = x_ref[pl.ds(dy * wp + dx, m), :]
            part = jnp.dot(win, w1_ref[pl.ds(tap * cin, cin), :],
                           preferred_element_type=jnp.float32)
            acc = part if acc is None else acc + part
    h = jnp.maximum(acc + b1_ref[...], 0.0)                      # (m, 3*CHANS) f32
    out = jnp.dot(h.astype(w2_ref.dtype), w2_ref[...],
                  preferred_element_type=jnp.float32) + b2_ref[...]   # (m, 128) f32
    # sigmoid only on the heatmap lanes (0..k_hm-1)
    lane = jax.lax.broadcasted_iota(jnp.int32, out.shape, 1)
    out = jnp.where(lane < k_hm, 1.0 / (1.0 + jnp.exp(-out)), out)
    # zero the junk padded-width columns so NMS / decode can use padded coords directly
    o_ref[...] = out * mask_ref[...]


def fused_heads(feat, w1, b1, w2, b2, tile_h=TILE_H_HEAD):
    """All three CenterNet heads (3x3 conv + ReLU -> 1x1 conv [+sigmoid]) in one
    Pallas call; output is lane-dense (128 wide), flattened over the padded-width
    grid (Ho*Wp rows) with the 2 junk columns per row zeroed in-kernel."""
    N, Ho, Wo, C = feat.shape
    Wp, Hp = Wo + 2, Ho + 2
    th = 1
    for d in range(1, min(tile_h, Ho) + 1):        # largest divisor of Ho <= tile_h
        if Ho % d == 0:
            th = d
    T = Ho // th
    m = th * Wp
    L = (th + 2) * Wp + 8
    featp = jnp.pad(feat, ((0, 0), (1, 1), (1, 1), (0, 0)))
    flat = jnp.pad(featp.reshape(N, Hp * Wp, C), ((0, 0), (0, 8), (0, 0)))
    # Halo-duplicated row tiles (only 2 overlapping rows per tile) so BlockSpec
    # blocks stay disjoint; this replaces the 9x im2col expansion.
    if T == 1:
        tiles = flat[:, None, :L, :]
    else:
        tiles = jnp.stack([flat[:, t * th * Wp: t * th * Wp + L, :] for t in range(T)], axis=1)
    # column-validity mask, built once at trace time (identical for every tile)
    colmask = (jnp.arange(m) % Wp < Wo).astype(jnp.float32).reshape(m, 1)
    cost = pl.CostEstimate(
        flops=int(N * T * (2 * m * (9 * C) * (3 * CHANS) + 2 * m * (3 * CHANS) * HEAD_PAD)),
        transcendentals=int(N * T * m * HEAD_PAD),
        bytes_accessed=int(tiles.size * 2 + w1.size * 2 + w2.size * 2
                           + (b1.size + b2.size + colmask.size) * 4
                           + N * T * m * HEAD_PAD * 4))
    out = pl.pallas_call(
        functools.partial(_fused_heads_kernel, m=m, wp=Wp, cin=C, k_hm=NUM_CLASSES),
        out_shape=jax.ShapeDtypeStruct((N, T, m, HEAD_PAD), jnp.float32),
        grid=(N, T),
        in_specs=[pl.BlockSpec((None, None, L, C), lambda n, t: (n, t, 0, 0)),
                  pl.BlockSpec(w1.shape, lambda n, t: (0, 0)),
                  pl.BlockSpec((1, b1.shape[0]), lambda n, t: (0, 0)),
                  pl.BlockSpec(w2.shape, lambda n, t: (0, 0)),
                  pl.BlockSpec((1, b2.shape[0]), lambda n, t: (0, 0)),
                  pl.BlockSpec((m, 1), lambda n, t: (0, 0))],
        out_specs=pl.BlockSpec((None, None, m, HEAD_PAD), lambda n, t: (n, t, 0, 0)),
        compiler_params=pltpu.CompilerParams(
            dimension_semantics=("parallel", "parallel"),
            vmem_limit_bytes=VMEM_LIMIT),
        cost_estimate=cost,
    )(tiles, w1, b1.reshape(1, -1), w2, b2.reshape(1, -1), colmask)
    # (N, T, th*Wp, 128) -> (N, Ho*Wp, 128); pure reshape, no copy, no slice.
    return out.reshape(N, Ho * Wp, HEAD_PAD), Wp


def _peak_nms_kernel(hmf_ref, o_ref, *, m, wp, base):
    # hmf_ref: (m + 2*base, K) flattened heatmap, junk columns already zero, one
    #          zero row of padding on each side (base = Wp + 8).
    # o_ref  : (m, K)          keep-scores on the padded-width grid.
    c = hmf_ref[pl.ds(base, m), :]
    mx = c
    for off in (-wp - 1, -wp, -wp + 1, -1, 1, wp - 1, wp, wp + 1):
        mx = jnp.maximum(mx, hmf_ref[pl.ds(base + off, m), :])
    o_ref[...] = jnp.where(c >= mx, c, 0.0)


def peak_nms_flat(hm_flat, wp):
    """3x3 max-pool pseudo-NMS over the flattened padded-width heatmap; the 8
    shifted maxima are computed in-kernel (no 9x window stack in HBM), gridded
    over batch. The zeroed junk columns act as the left/right -inf padding."""
    N, m, K = hm_flat.shape
    base = wp + 8
    flat = jnp.pad(hm_flat, ((0, 0), (base, base), (0, 0)))      # sigmoid>0 so 0-pad acts as -inf
    total = m + 2 * base
    return pl.pallas_call(
        functools.partial(_peak_nms_kernel, m=m, wp=wp, base=base),
        out_shape=jax.ShapeDtypeStruct((N, m, K), jnp.float32),
        grid=(N,),
        in_specs=[pl.BlockSpec((None, total, K), lambda n: (n, 0, 0))],
        out_specs=pl.BlockSpec((None, m, K), lambda n: (n, 0, 0)),
        compiler_params=pltpu.CompilerParams(dimension_semantics=("parallel",)),
    )(flat)


# ----------------------------------------------------------------------------
# Conv glue (im2col only for the two stride-2 backbone convs; ~2.25x expansion)
# ----------------------------------------------------------------------------

def im2col(x_nhwc, ksize, stride, pad):
    N, H, W, C = x_nhwc.shape
    xp = jnp.pad(x_nhwc, ((0, 0), (pad, pad), (pad, pad), (0, 0)))
    Ho = (H + 2 * pad - ksize) // stride + 1
    Wo = (W + 2 * pad - ksize) // stride + 1
    cols = []
    for dy in range(ksize):
        for dx in range(ksize):
            cols.append(xp[:, dy:dy + Ho * stride:stride, dx:dx + Wo * stride:stride, :])
    patches = jnp.concatenate(cols, axis=-1)                     # tap-major, channel-minor
    return patches.reshape(N * Ho * Wo, ksize * ksize * C), (N, Ho, Wo)


# ----------------------------------------------------------------------------
# Parameters
# ----------------------------------------------------------------------------

def _conv_init(key, kh, kw, cin, cout, bias_init=0.0):
    fan_in = kh * kw * cin
    w = jax.random.normal(key, (kh * kw * cin, cout), jnp.float32) / math.sqrt(fan_in)
    b = jnp.full((cout,), bias_init, jnp.float32)
    return w, b


def init_params(key):
    ks = jax.random.split(key, 8)
    p = {}
    p["bb1"] = _conv_init(ks[0], 3, 3, 3, CHANS)               # backbone conv1, stride 2
    p["bb2"] = _conv_init(ks[1], 3, 3, CHANS, CHANS)           # backbone conv2, stride 2
    p["hm1"] = _conv_init(ks[2], 3, 3, CHANS, CHANS)
    p["hm2"] = _conv_init(ks[3], 1, 1, CHANS, NUM_CLASSES, bias_init=-2.19)  # focal-loss prior
    p["wh1"] = _conv_init(ks[4], 3, 3, CHANS, CHANS)
    p["wh2"] = _conv_init(ks[5], 1, 1, CHANS, 2)
    p["rg1"] = _conv_init(ks[6], 3, 3, CHANS, CHANS)
    p["rg2"] = _conv_init(ks[7], 1, 1, CHANS, 2)
    return p


def fuse_params(p):
    """Fold 1/pixel_std into bb1, fuse the three head branches, pad the fused 1x1
    head matmul to 128 lanes, and cast weights to bf16 (biases stay f32)."""
    istd = (1.0 / PIXEL_STD).astype(jnp.float32)
    bb1_w = (p["bb1"][0] * jnp.tile(istd, 9)[:, None]).astype(jnp.bfloat16)
    head_w1 = jnp.concatenate([p["hm1"][0], p["wh1"][0], p["rg1"][0]], axis=1).astype(jnp.bfloat16)
    head_b1 = jnp.concatenate([p["hm1"][1], p["wh1"][1], p["rg1"][1]], axis=0)
    w2 = jnp.zeros((3 * CHANS, HEAD_PAD), jnp.float32)
    w2 = w2.at[0:CHANS, 0:NUM_CLASSES].set(p["hm2"][0])
    w2 = w2.at[CHANS:2 * CHANS, NUM_CLASSES:NUM_CLASSES + 2].set(p["wh2"][0])
    w2 = w2.at[2 * CHANS:3 * CHANS, NUM_CLASSES + 2:NUM_CLASSES + 4].set(p["rg2"][0])
    b2 = jnp.zeros((HEAD_PAD,), jnp.float32)
    b2 = b2.at[0:NUM_CLASSES].set(p["hm2"][1])
    b2 = b2.at[NUM_CLASSES:NUM_CLASSES + 2].set(p["wh2"][1])
    b2 = b2.at[NUM_CLASSES + 2:NUM_CLASSES + 4].set(p["rg2"][1])
    return {
        "bb1_w": bb1_w, "bb1_b": p["bb1"][1],
        "bb2_w": p["bb2"][0].astype(jnp.bfloat16), "bb2_b": p["bb2"][1],
        "head_w1": head_w1, "head_b1": head_b1,
        "head_w2": w2.astype(jnp.bfloat16), "head_b2": b2,
    }


# ----------------------------------------------------------------------------
# Forward (inference path of CenterNetDetector)
# ----------------------------------------------------------------------------

@jax.jit
def centernet_inference(params, images_nchw):
    N, C, H, W = images_nchw.shape
    # preprocess_image: (x - mean)/std. Mean-subtract fuses into the transpose in
    # XLA; 1/std is folded into the bb1 weights (zero padding then exactly matches
    # zero-padding the normalized image).
    x = jnp.transpose(images_nchw, (0, 2, 3, 1)).astype(jnp.float32) - PIXEL_MEAN
    x = x.astype(jnp.bfloat16)
    # TODO(synk): ImageList.from_tensors padding to size_divisibility is skipped
    # (inputs are already divisible); variable-size batching has no Pallas analogue.

    # backbone (output stride 4): 3x3 s2 conv + ReLU, twice (M-tiled matmul kernels).
    patches, (_, H1, W1) = im2col(x, 3, 2, 1)
    x = matmul_bias_relu(patches, params["bb1_w"], params["bb1_b"]).reshape(N, H1, W1, CHANS)
    patches, (_, H2, W2) = im2col(x, 3, 2, 1)
    feat = matmul_bias_relu(patches, params["bb2_w"], params["bb2_b"]).reshape(N, H2, W2, CHANS)

    # proposal generator: fused CenterNet heads (hm | wh | reg) in one kernel.
    heads_flat, Wp = fused_heads(feat, params["head_w1"], params["head_b1"],
                                 params["head_w2"], params["head_b2"])  # (N, Ho*Wp, 128) f32
    Ho, Wo, K = H2, W2, NUM_CLASSES
    hm_flat = heads_flat[..., :K]                                   # (N, Ho*Wp, K)
    wh_flat = heads_flat[..., K:K + 2]
    reg_flat = heads_flat[..., K + 2:K + 4]

    # decode: pseudo-NMS (Pallas) + top-k / gather / box math (glue), all in
    # padded-width (Wp) coordinates -- junk columns are zero so never peaks.
    keep = peak_nms_flat(hm_flat, Wp)                               # (N, Ho*Wp, K)
    scores_flat = keep.reshape(N, Ho * Wp * K)
    top_scores, top_idx = jax.lax.top_k(scores_flat, TOPK)
    classes = top_idx % K
    sp = top_idx // K                                               # flattened (Ho,Wp) index
    ys = (sp // Wp).astype(jnp.float32)
    xs = (sp % Wp).astype(jnp.float32)
    reg_g = jnp.take_along_axis(reg_flat, sp[..., None], axis=1)
    wh_g = jnp.take_along_axis(wh_flat, sp[..., None], axis=1)
    xs = xs + reg_g[..., 0]
    ys = ys + reg_g[..., 1]
    boxes = jnp.stack([xs - wh_g[..., 0] / 2.0, ys - wh_g[..., 1] / 2.0,
                       xs + wh_g[..., 0] / 2.0, ys + wh_g[..., 1] / 2.0],
                      axis=-1) * OUT_STRIDE
    # detector_postprocess: clip to image size (output size == input size here)
    boxes = jnp.clip(boxes,
                     jnp.zeros((4,), jnp.float32),
                     jnp.array([W, H, W, H], jnp.float32))
    hm_img = hm_flat.reshape(N, Ho, Wp, K)[:, :, :Wo, :]            # small slice, hm lanes only
    return {"boxes": boxes, "scores": top_scores, "classes": classes, "heatmap": hm_img}


if __name__ == "__main__":
    key = jax.random.PRNGKey(0)
    pkey, xkey = jax.random.split(key)
    params = fuse_params(init_params(pkey))
    images = jax.random.uniform(xkey, (2, 3, 16, 16), jnp.float32) * 255.0  # NCHW, BGR
    out = centernet_inference(params, images)
    jax.block_until_ready(out)
    assert out["boxes"].shape == (2, TOPK, 4)
    assert out["scores"].shape == (2, TOPK)
    assert out["classes"].shape == (2, TOPK)
    assert out["heatmap"].shape == (2, 4, 4, NUM_CLASSES)
    print("KERNEL_OK")
</pallas_src>

<mosaic_0001>
module attributes {stable_mosaic.version = 11 : i64} {
  func.func @_matmul_bias_relu_kernel(%arg0: i32, %arg1: memref<128x27xbf16, #tpu.memory_space<vmem>>, %arg2: memref<27x32xbf16, #tpu.memory_space<vmem>>, %arg3: memref<1x32xf32, #tpu.memory_space<vmem>>, %arg4: memref<128x32xbf16, #tpu.memory_space<vmem>>) attributes {dimension_semantics = [#tpu.dimension_semantics<parallel>], iteration_bounds = array<i64: 1>, scalar_prefetch = 0 : i64, scratch_operands = 0 : i64, tpu.core_type = #tpu.core_type<tc>, window_params = [{transform_indices = @transform_0, window_bounds = array<i64: 128, 27>}, {pipeline_mode = #tpu.pipeline_mode<synchronous>, transform_indices = @transform_1, window_bounds = array<i64: 27, 32>}, {pipeline_mode = #tpu.pipeline_mode<synchronous>, transform_indices = @transform_2, window_bounds = array<i64: 1, 32>}, {transform_indices = @transform_3, window_bounds = array<i64: 128, 32>}]} {
    %c0 = arith.constant 0 : index
    %c0_0 = arith.constant 0 : index
    %0 = vector.load %arg1[%c0, %c0_0] : memref<128x27xbf16, #tpu.memory_space<vmem>>, vector<128x27xbf16>
    %c0_1 = arith.constant 0 : index
    %c0_2 = arith.constant 0 : index
    %1 = vector.load %arg2[%c0_1, %c0_2] : memref<27x32xbf16, #tpu.memory_space<vmem>>, vector<27x32xbf16>
    %cst = arith.constant dense<0.000000e+00> : vector<128x32xf32>
    %2 = tpu.matmul %0, %1, %cst {dimension_numbers = #tpu.dot_dimension_numbers<[1], [0], [0], [1], [0, 0, 1, 1], [], []>} : vector<128x27xbf16>, vector<27x32xbf16>, vector<128x32xf32> -> vector<128x32xf32>
    %c0_3 = arith.constant 0 : index
    %c0_4 = arith.constant 0 : index
    %3 = vector.load %arg3[%c0_3, %c0_4] : memref<1x32xf32, #tpu.memory_space<vmem>>, vector<1x32xf32>
    %4 = vector.broadcast %3 : vector<1x32xf32> to vector<128x32xf32>
    %5 = arith.addf %2, %4 : vector<128x32xf32>
    %cst_5 = arith.constant 0.000000e+00 : f32
    %6 = vector.broadcast %cst_5 : f32 to vector<128x32xf32>
    %7 = arith.maximumf %5, %6 : vector<128x32xf32>
    %8 = arith.truncf %7 : vector<128x32xf32> to vector<128x32xbf16>
    %c0_6 = arith.constant 0 : index
    %c0_7 = arith.constant 0 : index
    %9 = vector.load %arg4[%c0_6, %c0_7] : memref<128x32xbf16, #tpu.memory_space<vmem>>, vector<128x32xbf16>
    tpu.vector_store %arg4[%c0_6, %c0_7], %8 {strides = array<i32>} : memref<128x32xbf16, #tpu.memory_space<vmem>>, vector<128x32xbf16>,
    return
  }
  func.func @transform_0(%arg0: i32) -> (i32, i32) {
    %c0_i32 = arith.constant 0 : i32
    %c0_i32_0 = arith.constant 0 : i32
    return %arg0, %c0_i32 : i32, i32
  }
  func.func @transform_1(%arg0: i32) -> (i32, i32) {
    %c0_i32 = arith.constant 0 : i32
    %c0_i32_0 = arith.constant 0 : i32
    %c0_i32_1 = arith.constant 0 : i32
    return %c0_i32, %c0_i32_0 : i32, i32
  }
  func.func @transform_2(%arg0: i32) -> (i32, i32) {
    %c0_i32 = arith.constant 0 : i32
    %c0_i32_0 = arith.constant 0 : i32
    %c0_i32_1 = arith.constant 0 : i32
    return %c0_i32, %c0_i32_0 : i32, i32
  }
  func.func @transform_3(%arg0: i32) -> (i32, i32) {
    %c0_i32 = arith.constant 0 : i32
    %c0_i32_0 = arith.constant 0 : i32
    return %arg0, %c0_i32 : i32, i32
  }
}

module attributes {stable_mosaic.version = 11 : i64} {
  func.func @_matmul_bias_relu_kernel(%arg0: i32, %arg1: memref<32x288xbf16, #tpu.memory_space<vmem>>, %arg2: memref<288x32xbf16, #tpu.memory_space<vmem>>, %arg3: memref<1x32xf32, #tpu.memory_space<vmem>>, %arg4: memref<32x32xbf16, #tpu.memory_space<vmem>>) attributes {dimension_semantics = [#tpu.dimension_semantics<parallel>], iteration_bounds = array<i64: 1>, scalar_prefetch = 0 : i64, scratch_operands = 0 : i64, tpu.core_type = #tpu.core_type<tc>, window_params = [{transform_indices = @transform_0, window_bounds = array<i64: 32, 288>}, {pipeline_mode = #tpu.pipeline_mode<synchronous>, transform_indices = @transform_1, window_bounds = array<i64: 288, 32>}, {pipeline_mode = #tpu.pipeline_mode<synchronous>, transform_indices = @transform_2, window_bounds = array<i64: 1, 32>}, {transform_indices = @transform_3, window_bounds = array<i64: 32, 32>}]} {
    %c0 = arith.constant 0 : index
    %c0_0 = arith.constant 0 : index
    %0 = vector.load %arg1[%c0, %c0_0] : memref<32x288xbf16, #tpu.memory_space<vmem>>, vector<32x288xbf16>
    %c0_1 = arith.constant 0 : index
    %c0_2 = arith.constant 0 : index
    %1 = vector.load %arg2[%c0_1, %c0_2] : memref<288x32xbf16, #tpu.memory_space<vmem>>, vector<288x32xbf16>
    %cst = arith.constant dense<0.000000e+00> : vector<32x32xf32>
    %2 = tpu.matmul %0, %1, %cst {dimension_numbers = #tpu.dot_dimension_numbers<[1], [0], [0], [1], [0, 0, 1, 1], [], []>} : vector<32x288xbf16>, vector<288x32xbf16>, vector<32x32xf32> -> vector<32x32xf32>
    %c0_3 = arith.constant 0 : index
    %c0_4 = arith.constant 0 : index
    %3 = vector.load %arg3[%c0_3, %c0_4] : memref<1x32xf32, #tpu.memory_space<vmem>>, vector<1x32xf32>
    %4 = vector.broadcast %3 : vector<1x32xf32> to vector<32x32xf32>
    %5 = arith.addf %2, %4 : vector<32x32xf32>
    %cst_5 = arith.constant 0.000000e+00 : f32
    %6 = vector.broadcast %cst_5 : f32 to vector<32x32xf32>
    %7 = arith.maximumf %5, %6 : vector<32x32xf32>
    %8 = arith.truncf %7 : vector<32x32xf32> to vector<32x32xbf16>
    %c0_6 = arith.constant 0 : index
    %c0_7 = arith.constant 0 : index
    %9 = vector.load %arg4[%c0_6, %c0_7] : memref<32x32xbf16, #tpu.memory_space<vmem>>, vector<32x32xbf16>
    tpu.vector_store %arg4[%c0_6, %c0_7], %8 {strides = array<i32>} : memref<32x32xbf16, #tpu.memory_space<vmem>>, vector<32x32xbf16>,
    return
  }
  func.func @transform_0(%arg0: i32) -> (i32, i32) {
    %c0_i32 = arith.constant 0 : i32
    %c0_i32_0 = arith.constant 0 : i32
    return %arg0, %c0_i32 : i32, i32
  }
  func.func @transform_1(%arg0: i32) -> (i32, i32) {
    %c0_i32 = arith.constant 0 : i32
    %c0_i32_0 = arith.constant 0 : i32
    %c0_i32_1 = arith.constant 0 : i32
    return %c0_i32, %c0_i32_0 : i32, i32
  }
  func.func @transform_2(%arg0: i32) -> (i32, i32) {
    %c0_i32 = arith.constant 0 : i32
    %c0_i32_0 = arith.constant 0 : i32
    %c0_i32_1 = arith.constant 0 : i32
    return %c0_i32, %c0_i32_0 : i32, i32
  }
  func.func @transform_3(%arg0: i32) -> (i32, i32) {
    %c0_i32 = arith.constant 0 : i32
    %c0_i32_0 = arith.constant 0 : i32
    return %arg0, %c0_i32 : i32, i32
  }
}

module attributes {stable_mosaic.version = 11 : i64} {
  func.func @_peak_nms_kernel(%arg0: i32, %arg1: memref<1x52x4xf32, #tpu.memory_space<vmem>>, %arg2: memref<1x24x4xf32, #tpu.memory_space<vmem>>) attributes {dimension_semantics = [#tpu.dimension_semantics<parallel>], iteration_bounds = array<i64: 2>, scalar_prefetch = 0 : i64, scratch_operands = 0 : i64, tpu.core_type = #tpu.core_type<tc>, window_params = [{transform_indices = @transform_0, window_bounds = array<i64: 1, 52, 4>}, {transform_indices = @transform_1, window_bounds = array<i64: 1, 24, 4>}]} {
    %c0 = arith.constant 0 : index
    %c14 = arith.constant 14 : index
    %c0_0 = arith.constant 0 : index
    %0 = vector.load %arg1[%c0, %c14, %c0_0] : memref<1x52x4xf32, #tpu.memory_space<vmem>>, vector<1x24x4xf32>
    %1 = vector.shape_cast %0 : vector<1x24x4xf32> to vector<24x4xf32>
    %c0_1 = arith.constant 0 : index
    %c7 = arith.constant 7 : index
    %c0_2 = arith.constant 0 : index
    %2 = vector.load %arg1[%c0_1, %c7, %c0_2] : memref<1x52x4xf32, #tpu.memory_space<vmem>>, vector<1x24x4xf32>
    %3 = vector.shape_cast %2 : vector<1x24x4xf32> to vector<24x4xf32>
    %4 = arith.maximumf %1, %3 : vector<24x4xf32>
    %c0_3 = arith.constant 0 : index
    %c8 = arith.constant 8 : index
    %c0_4 = arith.constant 0 : index
    %5 = vector.load %arg1[%c0_3, %c8, %c0_4] : memref<1x52x4xf32, #tpu.memory_space<vmem>>, vector<1x24x4xf32>
    %6 = vector.shape_cast %5 : vector<1x24x4xf32> to vector<24x4xf32>
    %7 = arith.maximumf %4, %6 : vector<24x4xf32>
    %c0_5 = arith.constant 0 : index
    %c9 = arith.constant 9 : index
    %c0_6 = arith.constant 0 : index
    %8 = vector.load %arg1[%c0_5, %c9, %c0_6] : memref<1x52x4xf32, #tpu.memory_space<vmem>>, vector<1x24x4xf32>
    %9 = vector.shape_cast %8 : vector<1x24x4xf32> to vector<24x4xf32>
    %10 = arith.maximumf %7, %9 : vector<24x4xf32>
    %c0_7 = arith.constant 0 : index
    %c13 = arith.constant 13 : index
    %c0_8 = arith.constant 0 : index
    %11 = vector.load %arg1[%c0_7, %c13, %c0_8] : memref<1x52x4xf32, #tpu.memory_space<vmem>>, vector<1x24x4xf32>
    %12 = vector.shape_cast %11 : vector<1x24x4xf32> to vector<24x4xf32>
    %13 = arith.maximumf %10, %12 : vector<24x4xf32>
    %c0_9 = arith.constant 0 : index
    %c15 = arith.constant 15 : index
    %c0_10 = arith.constant 0 : index
    %14 = vector.load %arg1[%c0_9, %c15, %c0_10] : memref<1x52x4xf32, #tpu.memory_space<vmem>>, vector<1x24x4xf32>
    %15 = vector.shape_cast %14 : vector<1x24x4xf32> to vector<24x4xf32>
    %16 = arith.maximumf %13, %15 : vector<24x4xf32>
    %c0_11 = arith.constant 0 : index
    %c19 = arith.constant 19 : index
    %c0_12 = arith.constant 0 : index
    %17 = vector.load %arg1[%c0_11, %c19, %c0_12] : memref<1x52x4xf32, #tpu.memory_space<vmem>>, vector<1x24x4xf32>
    %18 = vector.shape_cast %17 : vector<1x24x4xf32> to vector<24x4xf32>
    %19 = arith.maximumf %16, %18 : vector<24x4xf32>
    %c0_13 = arith.constant 0 : index
    %c20 = arith.constant 20 : index
    %c0_14 = arith.constant 0 : index
    %20 = vector.load %arg1[%c0_13, %c20, %c0_14] : memref<1x52x4xf32, #tpu.memory_space<vmem>>, vector<1x24x4xf32>
    %21 = vector.shape_cast %20 : vector<1x24x4xf32> to vector<24x4xf32>
    %22 = arith.maximumf %19, %21 : vector<24x4xf32>
    %c0_15 = arith.constant 0 : index
    %c21 = arith.constant 21 : index
    %c0_16 = arith.constant 0 : index
    %23 = vector.load %arg1[%c0_15, %c21, %c0_16] : memref<1x52x4xf32, #tpu.memory_space<vmem>>, vector<1x24x4xf32>
    %24 = vector.shape_cast %23 : vector<1x24x4xf32> to vector<24x4xf32>
    %25 = arith.maximumf %22, %24 : vector<24x4xf32>
    %26 = arith.cmpf oge, %1, %25 : vector<24x4xf32>
    %cst = arith.constant 0.000000e+00 : f32
    %27 = vector.broadcast %cst : f32 to vector<24x4xf32>
    %28 = arith.select %26, %1, %27 : vector<24x4xi1>, vector<24x4xf32>
    %c0_17 = arith.constant 0 : index
    %c0_18 = arith.constant 0 : index
    %c0_19 = arith.constant 0 : index
    %29 = vector.load %arg2[%c0_17, %c0_18, %c0_19] : memref<1x24x4xf32, #tpu.memory_space<vmem>>, vector<1x24x4xf32>
    %30 = vector.shape_cast %29 : vector<1x24x4xf32> to vector<24x4xf32>
    %31 = vector.shape_cast %28 : vector<24x4xf32> to vector<1x24x4xf32>
    tpu.vector_store %arg2[%c0_17, %c0_18, %c0_19], %31 {strides = array<i32>} : memref<1x24x4xf32, #tpu.memory_space<vmem>>, vector<1x24x4xf32>,
    return
  }
  func.func @transform_0(%arg0: i32) -> (i32, i32, i32) {
    %c0_i32 = arith.constant 0 : i32
    %c0_i32_0 = arith.constant 0 : i32
    %c0_i32_1 = arith.constant 0 : i32
    return %arg0, %c0_i32, %c0_i32_0 : i32, i32, i32
  }
  func.func @transform_1(%arg0: i32) -> (i32, i32, i32) {
    %c0_i32 = arith.constant 0 : i32
    %c0_i32_0 = arith.constant 0 : i32
    %c0_i32_1 = arith.constant 0 : i32
    return %arg0, %c0_i32, %c0_i32_0 : i32, i32, i32
  }
}

module attributes {stable_mosaic.version = 11 : i64} {
  func.func @_fused_heads_kernel(%arg0: i32, %arg1: i32, %arg2: memref<1x1x44x32xbf16, #tpu.memory_space<vmem>>, %arg3: memref<288x96xbf16, #tpu.memory_space<vmem>>, %arg4: memref<1x96xf32, #tpu.memory_space<vmem>>, %arg5: memref<96x128xbf16, #tpu.memory_space<vmem>>, %arg6: memref<1x128xf32, #tpu.memory_space<vmem>>, %arg7: memref<24x1xf32, #tpu.memory_space<vmem>>, %arg8: memref<1x1x24x128xf32, #tpu.memory_space<vmem>>) attributes {dimension_semantics = [#tpu.dimension_semantics<parallel>, #tpu.dimension_semantics<parallel>], iteration_bounds = array<i64: 2, 1>, scalar_prefetch = 0 : i64, scratch_operands = 0 : i64, tpu.core_type = #tpu.core_type<tc>, window_params = [{transform_indices = @transform_0, window_bounds = array<i64: 1, 1, 44, 32>}, {pipeline_mode = #tpu.pipeline_mode<synchronous>, transform_indices = @transform_1, window_bounds = array<i64: 288, 96>}, {pipeline_mode = #tpu.pipeline_mode<synchronous>, transform_indices = @transform_2, window_bounds = array<i64: 1, 96>}, {pipeline_mode = #tpu.pipeline_mode<synchronous>, transform_indices = @transform_3, window_bounds = array<i64: 96, 128>}, {pipeline_mode = #tpu.pipeline_mode<synchronous>, transform_indices = @transform_4, window_bounds = array<i64: 1, 128>}, {pipeline_mode = #tpu.pipeline_mode<synchronous>, transform_indices = @transform_5, window_bounds = array<i64: 24, 1>}, {transform_indices = @transform_6, window_bounds = array<i64: 1, 1, 24, 128>}]} {
    %c0 = arith.constant 0 : index
    %c0_0 = arith.constant 0 : index
    %c0_1 = arith.constant 0 : index
    %c0_2 = arith.constant 0 : index
    %0 = vector.load %arg2[%c0, %c0_0, %c0_1, %c0_2] : memref<1x1x44x32xbf16, #tpu.memory_space<vmem>>, vector<1x1x24x32xbf16>
    %1 = vector.shape_cast %0 : vector<1x1x24x32xbf16> to vector<24x32xbf16>
    %c0_3 = arith.constant 0 : index
    %c0_4 = arith.constant 0 : index
    %2 = vector.load %arg3[%c0_3, %c0_4] : memref<288x96xbf16, #tpu.memory_space<vmem>>, vector<32x96xbf16>
    %cst = arith.constant dense<0.000000e+00> : vector<24x96xf32>
    %3 = tpu.matmul %1, %2, %cst {dimension_numbers = #tpu.dot_dimension_numbers<[1], [0], [0], [1], [0, 0, 1, 1], [], []>} : vector<24x32xbf16>, vector<32x96xbf16>, vector<24x96xf32> -> vector<24x96xf32>
    %c0_5 = arith.constant 0 : index
    %c0_6 = arith.constant 0 : index
    %c1 = arith.constant 1 : index
    %c0_7 = arith.constant 0 : index
    %4 = vector.load %arg2[%c0_5, %c0_6, %c1, %c0_7] : memref<1x1x44x32xbf16, #tpu.memory_space<vmem>>, vector<1x1x24x32xbf16>
    %5 = vector.shape_cast %4 : vector<1x1x24x32xbf16> to vector<24x32xbf16>
    %c32 = arith.constant 32 : index
    %c0_8 = arith.constant 0 : index
    %6 = vector.load %arg3[%c32, %c0_8] : memref<288x96xbf16, #tpu.memory_space<vmem>>, vector<32x96xbf16>
    %cst_9 = arith.constant dense<0.000000e+00> : vector<24x96xf32>
    %7 = tpu.matmul %5, %6, %cst_9 {dimension_numbers = #tpu.dot_dimension_numbers<[1], [0], [0], [1], [0, 0, 1, 1], [], []>} : vector<24x32xbf16>, vector<32x96xbf16>, vector<24x96xf32> -> vector<24x96xf32>
    %8 = arith.addf %3, %7 : vector<24x96xf32>
    %c0_10 = arith.constant 0 : index
    %c0_11 = arith.constant 0 : index
    %c2 = arith.constant 2 : index
    %c0_12 = arith.constant 0 : index
    %9 = vector.load %arg2[%c0_10, %c0_11, %c2, %c0_12] : memref<1x1x44x32xbf16, #tpu.memory_space<vmem>>, vector<1x1x24x32xbf16>
    %10 = vector.shape_cast %9 : vector<1x1x24x32xbf16> to vector<24x32xbf16>
    %c64 = arith.constant 64 : index
    %c0_13 = arith.constant 0 : index
    %11 = vector.load %arg3[%c64, %c0_13] : memref<288x96xbf16, #tpu.memory_space<vmem>>, vector<32x96xbf16>
    %cst_14 = arith.constant dense<0.000000e+00> : vector<24x96xf32>
    %12 = tpu.matmul %10, %11, %cst_14 {dimension_numbers = #tpu.dot_dimension_numbers<[1], [0], [0], [1], [0, 0, 1, 1], [], []>} : vector<24x32xbf16>, vector<32x96xbf16>, vector<24x96xf32> -> vector<24x96xf32>
    %13 = arith.addf %8, %12 : vector<24x96xf32>
    %c0_15 = arith.constant 0 : index
    %c0_16 = arith.constant 0 : index
    %c6 = arith.constant 6 : index
    %c0_17 = arith.constant 0 : index
    %14 = vector.load %arg2[%c0_15, %c0_16, %c6, %c0_17] : memref<1x1x44x32xbf16, #tpu.memory_space<vmem>>, vector<1x1x24x32xbf16>
    %15 = vector.shape_cast %14 : vector<1x1x24x32xbf16> to vector<24x32xbf16>
    %c96 = arith.constant 96 : index
    %c0_18 = arith.constant 0 : index
    %16 = vector.load %arg3[%c96, %c0_18] : memref<288x96xbf16, #tpu.memory_space<vmem>>, vector<32x96xbf16>
    %cst_19 = arith.constant dense<0.000000e+00> : vector<24x96xf32>
    %17 = tpu.matmul %15, %16, %cst_19 {dimension_numbers = #tpu.dot_dimension_numbers<[1], [0], [0], [1], [0, 0, 1, 1], [], []>} : vector<24x32xbf16>, vector<32x96xbf16>, vector<24x96xf32> -> vector<24x96xf32>
    %18 = arith.addf %13, %17 : vector<24x96xf32>
    %c0_20 = arith.constant 0 : index
    %c0_21 = arith.constant 0 : index
    %c7 = arith.constant 7 : index
    %c0_22 = arith.constant 0 : index
    %19 = vector.load %arg2[%c0_20, %c0_21, %c7, %c0_22] : memref<1x1x44x32xbf16, #tpu.memory_space<vmem>>, vector<1x1x24x32xbf16>
    %20 = vector.shape_cast %19 : vector<1x1x24x32xbf16> to vector<24x32xbf16>
    %c128 = arith.constant 128 : index
    %c0_23 = arith.constant 0 : index
    %21 = vector.load %arg3[%c128, %c0_23] : memref<288x96xbf16, #tpu.memory_space<vmem>>, vector<32x96xbf16>
    %cst_24 = arith.constant dense<0.000000e+00> : vector<24x96xf32>
    %22 = tpu.matmul %20, %21, %cst_24 {dimension_numbers = #tpu.dot_dimension_numbers<[1], [0], [0], [1], [0, 0, 1, 1], [], []>} : vector<24x32xbf16>, vector<32x96xbf16>, vector<24x96xf32> -> vector<24x96xf32>
    %23 = arith.addf %18, %22 : vector<24x96xf32>
    %c0_25 = arith.constant 0 : index
    %c0_26 = arith.constant 0 : index
    %c8 = arith.constant 8 : index
    %c0_27 = arith.constant 0 : index
    %24 = vector.load %arg2[%c0_25, %c0_26, %c8, %c0_27] : memref<1x1x44x32xbf16, #tpu.memory_space<vmem>>, vector<1x1x24x32xbf16>
    %25 = vector.shape_cast %24 : vector<1x1x24x32xbf16> to vector<24x32xbf16>
    %c160 = arith.constant 160 : index
    %c0_28 = arith.constant 0 : index
    %26 = vector.load %arg3[%c160, %c0_28] : memref<288x96xbf16, #tpu.memory_space<vmem>>, vector<32x96xbf16>
    %cst_29 = arith.constant dense<0.000000e+00> : vector<24x96xf32>
    %27 = tpu.matmul %25, %26, %cst_29 {dimension_numbers = #tpu.dot_dimension_numbers<[1], [0], [0], [1], [0, 0, 1, 1], [], []>} : vector<24x32xbf16>, vector<32x96xbf16>, vector<24x96xf32> -> vector<24x96xf32>
    %28 = arith.addf %23, %27 : vector<24x96xf32>
    %c0_30 = arith.constant 0 : index
    %c0_31 = arith.constant 0 : index
    %c12 = arith.constant 12 : index
    %c0_32 = arith.constant 0 : index
    %29 = vector.load %arg2[%c0_30, %c0_31, %c12, %c0_32] : memref<1x1x44x32xbf16, #tpu.memory_space<vmem>>, vector<1x1x24x32xbf16>
    %30 = vector.shape_cast %29 : vector<1x1x24x32xbf16> to vector<24x32xbf16>
    %c192 = arith.constant 192 : index
    %c0_33 = arith.constant 0 : index
    %31 = vector.load %arg3[%c192, %c0_33] : memref<288x96xbf16, #tpu.memory_space<vmem>>, vector<32x96xbf16>
    %cst_34 = arith.constant dense<0.000000e+00> : vector<24x96xf32>
    %32 = tpu.matmul %30, %31, %cst_34 {dimension_numbers = #tpu.dot_dimension_numbers<[1], [0], [0], [1], [0, 0, 1, 1], [], []>} : vector<24x32xbf16>, vector<32x96xbf16>, vector<24x96xf32> -> vector<24x96xf32>
    %33 = arith.addf %28, %32 : vector<24x96xf32>
    %c0_35 = arith.constant 0 : index
    %c0_36 = arith.constant 0 : index
    %c13 = arith.constant 13 : index
    %c0_37 = arith.constant 0 : index
    %34 = vector.load %arg2[%c0_35, %c0_36, %c13, %c0_37] : memref<1x1x44x32xbf16, #tpu.memory_space<vmem>>, vector<1x1x24x32xbf16>
    %35 = vector.shape_cast %34 : vector<1x1x24x32xbf16> to vector<24x32xbf16>
    %c224 = arith.constant 224 : index
    %c0_38 = arith.constant 0 : index
    %36 = vector.load %arg3[%c224, %c0_38] : memref<288x96xbf16, #tpu.memory_space<vmem>>, vector<32x96xbf16>
    %cst_39 = arith.constant dense<0.000000e+00> : vector<24x96xf32>
    %37 = tpu.matmul %35, %36, %cst_39 {dimension_numbers = #tpu.dot_dimension_numbers<[1], [0], [0], [1], [0, 0, 1, 1], [], []>} : vector<24x32xbf16>, vector<32x96xbf16>, vector<24x96xf32> -> vector<24x96xf32>
    %38 = arith.addf %33, %37 : vector<24x96xf32>
    %c0_40 = arith.constant 0 : index
    %c0_41 = arith.constant 0 : index
    %c14 = arith.constant 14 : index
    %c0_42 = arith.constant 0 : index
    %39 = vector.load %arg2[%c0_40, %c0_41, %c14, %c0_42] : memref<1x1x44x32xbf16, #tpu.memory_space<vmem>>, vector<1x1x24x32xbf16>
    %40 = vector.shape_cast %39 : vector<1x1x24x32xbf16> to vector<24x32xbf16>
    %c256 = arith.constant 256 : index
    %c0_43 = arith.constant 0 : index
    %41 = vector.load %arg3[%c256, %c0_43] : memref<288x96xbf16, #tpu.memory_space<vmem>>, vector<32x96xbf16>
    %cst_44 = arith.constant dense<0.000000e+00> : vector<24x96xf32>
    %42 = tpu.matmul %40, %41, %cst_44 {dimension_numbers = #tpu.dot_dimension_numbers<[1], [0], [0], [1], [0, 0, 1, 1], [], []>} : vector<24x32xbf16>, vector<32x96xbf16>, vector<24x96xf32> -> vector<24x96xf32>
    %43 = arith.addf %38, %42 : vector<24x96xf32>
    %c0_45 = arith.constant 0 : index
    %c0_46 = arith.constant 0 : index
    %44 = vector.load %arg4[%c0_45, %c0_46] : memref<1x96xf32, #tpu.memory_space<vmem>>, vector<1x96xf32>
    %45 = vector.broadcast %44 : vector<1x96xf32> to vector<24x96xf32>
    %46 = arith.addf %43, %45 : vector<24x96xf32>
    %cst_47 = arith.constant 0.000000e+00 : f32
    %47 = vector.broadcast %cst_47 : f32 to vector<24x96xf32>
    %48 = arith.maximumf %46, %47 : vector<24x96xf32>
    %49 = arith.truncf %48 : vector<24x96xf32> to vector<24x96xbf16>
    %c0_48 = arith.constant 0 : index
    %c0_49 = arith.constant 0 : index
    %50 = vector.load %arg5[%c0_48, %c0_49] : memref<96x128xbf16, #tpu.memory_space<vmem>>, vector<96x128xbf16>
    %cst_50 = arith.constant dense<0.000000e+00> : vector<24x128xf32>
    %51 = tpu.matmul %49, %50, %cst_50 {dimension_numbers = #tpu.dot_dimension_numbers<[1], [0], [0], [1], [0, 0, 1, 1], [], []>} : vector<24x96xbf16>, vector<96x128xbf16>, vector<24x128xf32> -> vector<24x128xf32>
    %c0_51 = arith.constant 0 : index
    %c0_52 = arith.constant 0 : index
    %52 = vector.load %arg6[%c0_51, %c0_52] : memref<1x128xf32, #tpu.memory_space<vmem>>, vector<1x128xf32>
    %53 = vector.broadcast %52 : vector<1x128xf32> to vector<24x128xf32>
    %54 = arith.addf %51, %53 : vector<24x128xf32>
    %55 = tpu.iota {dimensions = array<i32: 1>} : vector<24x128xi32>
    %c4_i32 = arith.constant 4 : i32
    %56 = vector.broadcast %c4_i32 : i32 to vector<24x128xi32>
    %57 = arith.cmpi slt, %55, %56 : vector<24x128xi32>
    %cst_53 = arith.constant 0.000000e+00 : f32
    %58 = vector.broadcast %cst_53 : f32 to vector<24x128xf32>
    %59 = arith.subf %58, %54 : vector<24x128xf32>
    %60 = math.exp %59 : vector<24x128xf32>
    %cst_54 = arith.constant 1.000000e+00 : f32
    %61 = vector.broadcast %cst_54 : f32 to vector<24x128xf32>
    %62 = arith.addf %61, %60 : vector<24x128xf32>
    %cst_55 = arith.constant 1.000000e+00 : f32
    %63 = vector.broadcast %cst_55 : f32 to vector<24x128xf32>
    %64 = arith.divf %63, %62 : vector<24x128xf32>
    %65 = arith.select %57, %64, %54 : vector<24x128xi1>, vector<24x128xf32>
    %c0_56 = arith.constant 0 : index
    %c0_57 = arith.constant 0 : index
    %66 = vector.load %arg7[%c0_56, %c0_57] : memref<24x1xf32, #tpu.memory_space<vmem>>, vector<24x1xf32>
    %67 = vector.broadcast %66 : vector<24x1xf32> to vector<24x128xf32>
    %68 = arith.mulf %65, %67 : vector<24x128xf32>
    %c0_58 = arith.constant 0 : index
    %c0_59 = arith.constant 0 : index
    %c0_60 = arith.constant 0 : index
    %c0_61 = arith.constant 0 : index
    %69 = vector.load %arg8[%c0_58, %c0_59, %c0_60, %c0_61] : memref<1x1x24x128xf32, #tpu.memory_space<vmem>>, vector<1x1x24x128xf32>
    %70 = vector.shape_cast %69 : vector<1x1x24x128xf32> to vector<24x128xf32>
    %71 = vector.shape_cast %68 : vector<24x128xf32> to vector<1x1x24x128xf32>
    tpu.vector_store %arg8[%c0_58, %c0_59, %c0_60, %c0_61], %71 {strides = array<i32>} : memref<1x1x24x128xf32, #tpu.memory_space<vmem>>, vector<1x1x24x128xf32>,
    return
  }
  func.func @transform_0(%arg0: i32, %arg1: i32) -> (i32, i32, i32, i32) {
    %c0_i32 = arith.constant 0 : i32
    %c0_i32_0 = arith.constant 0 : i32
    %c0_i32_1 = arith.constant 0 : i32
    return %arg0, %arg1, %c0_i32, %c0_i32_0 : i32, i32, i32, i32
  }
  func.func @transform_1(%arg0: i32, %arg1: i32) -> (i32, i32) {
    %c0_i32 = arith.constant 0 : i32
    %c0_i32_0 = arith.constant 0 : i32
    %c0_i32_1 = arith.constant 0 : i32
    return %c0_i32, %c0_i32_0 : i32, i32
  }
  func.func @transform_2(%arg0: i32, %arg1: i32) -> (i32, i32) {
    %c0_i32 = arith.constant 0 : i32
    %c0_i32_0 = arith.constant 0 : i32
    %c0_i32_1 = arith.constant 0 : i32
    return %c0_i32, %c0_i32_0 : i32, i32
  }
  func.func @transform_3(%arg0: i32, %arg1: i32) -> (i32, i32) {
    %c0_i32 = arith.constant 0 : i32
    %c0_i32_0 = arith.constant 0 : i32
    %c0_i32_1 = arith.constant 0 : i32
    return %c0_i32, %c0_i32_0 : i32, i32
  }
  func.func @transform_4(%arg0: i32, %arg1: i32) -> (i32, i32) {
    %c0_i32 = arith.constant 0 : i32
    %c0_i32_0 = arith.constant 0 : i32
    %c0_i32_1 = arith.constant 0 : i32
    return %c0_i32, %c0_i32_0 : i32, i32
  }
  func.func @transform_5(%arg0: i32, %arg1: i32) -> (i32, i32) {
    %c0_i32 = arith.constant 0 : i32
    %c0_i32_0 = arith.constant 0 : i32
    %c0_i32_1 = arith.constant 0 : i32
    return %c0_i32, %c0_i32_0 : i32, i32
  }
  func.func @transform_6(%arg0: i32, %arg1: i32) -> (i32, i32, i32, i32) {
    %c0_i32 = arith.constant 0 : i32
    %c0_i32_0 = arith.constant 0 : i32
    %c0_i32_1 = arith.constant 0 : i32
    return %arg0, %arg1, %c0_i32, %c0_i32_0 : i32, i32, i32, i32
  }
}

</mosaic_0001>

<llo_original>
// kernel: centernet_inference.4
$region0: #{centernet_inference.4}
  #allocation0 [shape = 'u32[]', space=smem, size = 0x4, offset = 0x4, fixed_abs, tag = 'smem constant byte address 0x4 - core index']
  #allocation1 [shape = 'u32[144,128]{1,0:T(1,128)}', space=vmem, size = 0x12000, scoped, tag = 'internal scratch']
  %s0 = inlined_call_operand.vmem [shape: bf16[128,27], index: 0, kind: input, shape index: {}]
  %s1 = inlined_call_operand.vmem [shape: bf16[27,32], index: 1, kind: input, shape index: {}]
  %s2 = inlined_call_operand.vmem [shape: f32[1,32], index: 2, kind: input, shape index: {}]
  %s3 = inlined_call_operand.vmem [shape: bf16[128,32], index: 3, kind: output, shape index: {}]
  %s4 = sld [smem:[#allocation0]]
  $region22: #{centernet_inference.4} parent=0
    _
  %s6 = ssub.s32 1, %s4
  %s7 = scalar_select 0, %s6, %s4
  // Predicated region
  $region2: #{centernet_inference.4} parent=0 // pred_check
    _
  $region3: #{centernet_inference.4} parent=0 // pred_check_branch
    %9 = sbr.rel (0) target = $region5
  $region4: #{centernet_inference.4} parent=0 // pred_region
    _
  $region5: #{centernet_inference.4} parent=0 // pred_fallthru
    _
  // Predicated region
  $region6: #{centernet_inference.4} parent=0 // pred_check
    _
  $region7: #{centernet_inference.4} parent=0 // pred_check_branch
    %11 = sbr.rel (0) target = $region9
  $region8: #{centernet_inference.4} parent=0 // pred_region
    _
  $region9: #{centernet_inference.4} parent=0 // pred_fallthru
    _
  // Predicated region
  $region10: #{centernet_inference.4} parent=0 // pred_check
    _
  $region11: #{centernet_inference.4} parent=0 // pred_check_branch
    %13 = sbr.rel (0) target = $region13
  $region12: #{centernet_inference.4} parent=0 // pred_region
    _
  $region13: #{centernet_inference.4} parent=0 // pred_fallthru
    _
  %v15 = vld [vmem:[%s0] sm:$0xf]
  %v16 = vld [vmem:[%s0 + $0x4] sm:$0xf]
  %v17 = vld [vmem:[%s0 + $0x8] sm:$0xf]
  %v18 = vld [vmem:[%s0 + $0xc] sm:$0xf]
  %v19 = vld [vmem:[%s0 + $0x10] sm:$0xf]
  %v20 = vld [vmem:[%s0 + $0x14] sm:$0xf]
  %v21 = vld [vmem:[%s0 + $0x18] sm:$0xf]
  %v22 = vld [vmem:[%s0 + $0x1c] sm:$0xf]
  %v23 = vld [vmem:[%s0 + $0x20] sm:$0xf]
  %v24 = vld [vmem:[%s0 + $0x24] sm:$0xf]
  %v25 = vld [vmem:[%s0 + $0x28] sm:$0xf]
  %v26 = vld [vmem:[%s0 + $0x2c] sm:$0xf]
  %v27 = vld [vmem:[%s0 + $0x30] sm:$0xf]
  %v28 = vld [vmem:[%s0 + $0x34] sm:$0xf]
  %v29 = vld [vmem:[%s0 + $0x38] sm:$0xf]
  %v30 = vld [vmem:[%s0 + $0x3c] sm:$0xf]
  %v31 = vld [vmem:[%s1] sm:$0xf]
  %v32 = vld [vmem:[%s1 + $0x4] sm:$0xf]
  %v33 = vld [vmem:[%s1 + $0x8] sm:$0xf]
  %v34 = vld [vmem:[%s1 + $0xc] sm:$0x3]
  %v35 = vld [vmem:[%s2] sm:$0x1]
  %v37 = vlaneseq
  %v38 = vshrl.u32 %v37, 7
  %v39 = vsub.s32 0, %v38
  %v40 = vrot.slane %v35, %v39
  %v58 = vunpack.c.l.b16 %v15
  %v59 = vunpack.c.l.b16 %v16
  %v60 = vunpack.c.l.b16 %v17
  %v61 = vunpack.c.l.b16 %v18
  %v62 = vunpack.c.l.b16 %v19
  %v63 = vunpack.c.l.b16 %v20
  %v64 = vunpack.c.l.b16 %v21
  %v65 = vunpack.c.l.b16 %v22
  %v66 = vunpack.c.l.b16 %v23
  %v67 = vunpack.c.l.b16 %v24
  %v68 = vunpack.c.l.b16 %v25
  %v69 = vunpack.c.l.b16 %v26
  %v70 = vunpack.c.l.b16 %v27
  %v71 = vunpack.c.l.b16 %v28
  %v72 = vunpack.c.l.b16 %v29
  %v73 = vunpack.c.l.b16 %v30
  %v74 = vpack.c.b16 %v59, %v58
  %v75 = vpack.c.b16 %v61, %v60
  %v76 = vpack.c.b16 %v63, %v62
  %v77 = vpack.c.b16 %v65, %v64
  %v78 = vpack.c.b16 %v67, %v66
  %v79 = vpack.c.b16 %v69, %v68
  %v80 = vpack.c.b16 %v71, %v70
  %v81 = vpack.c.b16 %v73, %v72
  %v86 = vunpack.c.l.b16 %v31
  %v87 = vunpack.c.l.b16 %v32
  %v88 = vunpack.c.l.b16 %v33
  %v89 = vunpack.c.l.b16 %v34
  %v90 = vpack.c.b16 %v87, %v86
  %v91 = vpack.c.b16 %v89, %v88
  %vm93 = vcmask 220160
  %v95 = vsel %vm93, %v74, 0
  %v98 = vsel %vm93, %v75, 0
  %v101 = vsel %vm93, %v76, 0
  %v104 = vsel %vm93, %v77, 0
  %v107 = vsel %vm93, %v78, 0
  %v110 = vsel %vm93, %v79, 0
  %v113 = vsel %vm93, %v80, 0
  %v116 = vsel %vm93, %v81, 0
  %vm118 = vcmask 1044480
  %vm119 = vcmask 1045504
  %v120 = vsel %vm118, 4294967295, 65535
  %v121 = vsel %vm119, %v120, 0
  %v123 = vand.u32 %v91, %v121
  %125 = vmatprep.subr.bf16.mxu0 0
  %126 = vmatpush1.bf16.msra.mxu0 0
  %127 = vmatprep.subr.bf16.mxu0 0
  %128 = vmatpush1.bf16.msra.mxu0 0
  %129 = vmatprep.subr.bf16.mxu0 0
  %130 = vmatpush1.bf16.msra.mxu0 0
  %131 = vmatprep.subr.bf16.mxu0 0
  %132 = vmatpush1.bf16.msra.mxu0 0
  %133 = vmatprep.subr.bf16.mxu0 0
  %134 = vmatpush1.bf16.msra.mxu0 0
  %135 = vmatprep.subr.bf16.mxu0 0
  %136 = vmatpush1.bf16.msra.mxu0 0
  %137 = vmatprep.subr.bf16.mxu0 0
  %138 = vmatpush1.bf16.msra.mxu0 %v123
  %139 = vmatprep.subr.bf16.mxu0 0
  %140 = vmatpush1.bf16.msra.mxu0 %v90
  %141 = vmatprep.subr.bf16.mxu0 0
  %142 = vmatpush2.bf16.msra.mxu0 0
  %143 = vmatprep.subr.bf16.mxu0 0
  %144 = vmatpush2.bf16.msra.mxu0 0
  %145 = vmatprep.subr.bf16.mxu0 0
  %146 = vmatpush2.bf16.msra.mxu0 0
  %147 = vmatprep.subr.bf16.mxu0 0
  %148 = vmatpush2.bf16.msra.mxu0 0
  %149 = vmatprep.subr.bf16.mxu0 0
  %150 = vmatpush2.bf16.msra.mxu0 0
  %151 = vmatprep.subr.bf16.mxu0 0
  %152 = vmatpush2.bf16.msra.mxu0 0
  %153 = vmatprep.subr.bf16.mxu0 0
  %154 = vmatpush2.bf16.msra.mxu0 0
  %155 = vmatprep.subr.bf16.mxu0 0
  %156 = vmatpush2.bf16.msra.mxu0 0
  %157 = vmatprep.mubr.bf16.mxu0 0
  %158 = vmatmul.mubr.bf16.gmra.mxu0 %v95
  %v159 = vpop.f32.mrf.mxu0
  %v160 = vadd.f32 %v40, %v159
  %v161 = vpop.f32.mrf.mxu0
  %v162 = vpop.f32.mrf.mxu0
  %v163 = vadd.f32 %v40, %v162
  %v164 = vpop.f32.mrf.mxu0
  %165 = vmatprep.mubr.bf16.mxu0 0
  %166 = vmatmul.mubr.bf16.gmra.mxu0 %v98
  %v167 = vpop.f32.mrf.mxu0
  %v168 = vadd.f32 %v40, %v167
  %v169 = vpop.f32.mrf.mxu0
  %v170 = vpop.f32.mrf.mxu0
  %v171 = vadd.f32 %v40, %v170
  %v172 = vpop.f32.mrf.mxu0
  %173 = vmatprep.mubr.bf16.mxu0 0
  %174 = vmatmul.mubr.bf16.gmra.mxu0 %v101
  %v175 = vpop.f32.mrf.mxu0
  %v176 = vadd.f32 %v40, %v175
  %v177 = vpop.f32.mrf.mxu0
  %v178 = vpop.f32.mrf.mxu0
  %v179 = vadd.f32 %v40, %v178
  %v180 = vpop.f32.mrf.mxu0
  %181 = vmatprep.mubr.bf16.mxu0 0
  %182 = vmatmul.mubr.bf16.gmra.mxu0 %v104
  %v183 = vpop.f32.mrf.mxu0
  %v184 = vadd.f32 %v40, %v183
  %v185 = vpop.f32.mrf.mxu0
  %v186 = vpop.f32.mrf.mxu0
  %v187 = vadd.f32 %v40, %v186
  %v188 = vpop.f32.mrf.mxu0
  %189 = vmatprep.mubr.bf16.mxu0 0
  %190 = vmatmul.mubr.bf16.gmra.mxu0 %v107
  %v191 = vpop.f32.mrf.mxu0
  %v192 = vadd.f32 %v40, %v191
  %v193 = vpop.f32.mrf.mxu0
  %v194 = vpop.f32.mrf.mxu0
  %v195 = vadd.f32 %v40, %v194
  %v196 = vpop.f32.mrf.mxu0
  %197 = vmatprep.mubr.bf16.mxu0 0
  %198 = vmatmul.mubr.bf16.gmra.mxu0 %v110
  %v199 = vpop.f32.mrf.mxu0
  %v200 = vadd.f32 %v40, %v199
  %v201 = vpop.f32.mrf.mxu0
  %v202 = vpop.f32.mrf.mxu0
  %v203 = vadd.f32 %v40, %v202
  %v204 = vpop.f32.mrf.mxu0
  %205 = vmatprep.mubr.bf16.mxu0 0
  %206 = vmatmul.mubr.bf16.gmra.mxu0 %v113
  %v207 = vpop.f32.mrf.mxu0
  %v208 = vadd.f32 %v40, %v207
  %v209 = vpop.f32.mrf.mxu0
  %v210 = vpop.f32.mrf.mxu0
  %v211 = vadd.f32 %v40, %v210
  %v212 = vpop.f32.mrf.mxu0
  %213 = vmatprep.mubr.bf16.mxu0 0
  %214 = vmatmul.mubr.bf16.gmra.mxu0 %v116
  %v215 = vpop.f32.mrf.mxu0
  %v216 = vadd.f32 %v40, %v215
  %v217 = vpop.f32.mrf.mxu0
  %v218 = vpop.f32.mrf.mxu0
  %v219 = vadd.f32 %v40, %v218
  %v220 = vpop.f32.mrf.mxu0
  %221 = vdwg.mxu0
  %v222 = vmax.f32 %v160, 0.0
  %v223 = vmax.f32 %v163, 0.0
  %v224 = vmax.f32 %v168, 0.0
  %v225 = vmax.f32 %v171, 0.0
  %v226 = vmax.f32 %v176, 0.0
  %v227 = vmax.f32 %v179, 0.0
  %v228 = vmax.f32 %v184, 0.0
  %v229 = vmax.f32 %v187, 0.0
  %v230 = vmax.f32 %v192, 0.0
  %v231 = vmax.f32 %v195, 0.0
  %v232 = vmax.f32 %v200, 0.0
  %v233 = vmax.f32 %v203, 0.0
  %v234 = vmax.f32 %v208, 0.0
  %v235 = vmax.f32 %v211, 0.0
  %v236 = vmax.f32 %v216, 0.0
  %v237 = vmax.f32 %v219, 0.0
  %v238 = vpack.c.bf16 %v223, %v222
  %v239 = vpack.c.bf16 %v225, %v224
  %v240 = vpack.c.bf16 %v227, %v226
  %v241 = vpack.c.bf16 %v229, %v228
  %v242 = vpack.c.bf16 %v231, %v230
  %v243 = vpack.c.bf16 %v233, %v232
  %v244 = vpack.c.bf16 %v235, %v234
  %v245 = vpack.c.bf16 %v237, %v236
  %v254 = vunpack.c.l.b16 %v238
  %v255 = vunpack.c.h.b16 %v238
  %v256 = vunpack.c.l.b16 %v239
  %v257 = vunpack.c.h.b16 %v239
  %v258 = vunpack.c.l.b16 %v240
  %v259 = vunpack.c.h.b16 %v240
  %v260 = vunpack.c.l.b16 %v241
  %v261 = vunpack.c.h.b16 %v241
  %v262 = vunpack.c.l.b16 %v242
  %v263 = vunpack.c.h.b16 %v242
  %v264 = vunpack.c.l.b16 %v243
  %v265 = vunpack.c.h.b16 %v243
  %v266 = vunpack.c.l.b16 %v244
  %v267 = vunpack.c.h.b16 %v244
  %v268 = vunpack.c.l.b16 %v245
  %v269 = vunpack.c.h.b16 %v245
  %v270 = vpack.c.b16 %v254, %v254
  %v271 = vpack.c.b16 %v255, %v255
  %v272 = vpack.c.b16 %v256, %v256
  %v273 = vpack.c.b16 %v257, %v257
  %v274 = vpack.c.b16 %v258, %v258
  %v275 = vpack.c.b16 %v259, %v259
  %v276 = vpack.c.b16 %v260, %v260
  %v277 = vpack.c.b16 %v261, %v261
  %v278 = vpack.c.b16 %v262, %v262
  %v279 = vpack.c.b16 %v263, %v263
  %v280 = vpack.c.b16 %v264, %v264
  %v281 = vpack.c.b16 %v265, %v265
  %v282 = vpack.c.b16 %v266, %v266
  %v283 = vpack.c.b16 %v267, %v267
  %v284 = vpack.c.b16 %v268, %v268
  %v285 = vpack.c.b16 %v269, %v269
  %vm302 = vcmask 257024
  %303 = vst.msk [vmem:[%s3] sm:$0xf] %vm302, %v270
  %304 = vst.msk [vmem:[%s3 + $0x4] sm:$0xf] %vm302, %v271
  %305 = vst.msk [vmem:[%s3 + $0x8] sm:$0xf] %vm302, %v272
  %306 = vst.msk [vmem:[%s3 + $0xc] sm:$0xf] %vm302, %v273
  %307 = vst.msk [vmem:[%s3 + $0x10] sm:$0xf] %vm302, %v274
  %308 = vst.msk [vmem:[%s3 + $0x14] sm:$0xf] %vm302, %v275
  %309 = vst.msk [vmem:[%s3 + $0x18] sm:$0xf] %vm302, %v276
  %310 = vst.msk [vmem:[%s3 + $0x1c] sm:$0xf] %vm302, %v277
  %311 = vst.msk [vmem:[%s3 + $0x20] sm:$0xf] %vm302, %v278
  %312 = vst.msk [vmem:[%s3 + $0x24] sm:$0xf] %vm302, %v279
  %313 = vst.msk [vmem:[%s3 + $0x28] sm:$0xf] %vm302, %v280
  %314 = vst.msk [vmem:[%s3 + $0x2c] sm:$0xf] %vm302, %v281
  %315 = vst.msk [vmem:[%s3 + $0x30] sm:$0xf] %vm302, %v282
  %316 = vst.msk [vmem:[%s3 + $0x34] sm:$0xf] %vm302, %v283
  %317 = vst.msk [vmem:[%s3 + $0x38] sm:$0xf] %vm302, %v284
  %318 = vst.msk [vmem:[%s3 + $0x3c] sm:$0xf] %vm302, %v285
  // Predicated region
  $region14: #{centernet_inference.4} parent=0 // pred_check
    _
  $region15: #{centernet_inference.4} parent=0 // pred_check_branch
    %320 = sbr.rel (0) target = $region17
  $region16: #{centernet_inference.4} parent=0 // pred_region
    _
  $region17: #{centernet_inference.4} parent=0 // pred_fallthru
    _
  // Predicated region
  $region18: #{centernet_inference.4} parent=0 // pred_check
    _
  $region19: #{centernet_inference.4} parent=0 // pred_check_branch
    %322 = sbr.rel (0) target = $region21
  $region20: #{centernet_inference.4} parent=0 // pred_region
    _
  $region21: #{centernet_inference.4} parent=0 // pred_fallthru
    _

// kernel: centernet_inference.5
$region0: #{centernet_inference.5}
  #allocation0 [shape = 'u32[]', space=smem, size = 0x4, offset = 0x4, fixed_abs, tag = 'smem constant byte address 0x4 - core index']
  #allocation1 [shape = 'u32[144,128]{1,0:T(1,128)}', space=vmem, size = 0x12000, scoped, tag = 'internal scratch']
  %s0 = inlined_call_operand.vmem [shape: bf16[32,288], index: 0, kind: input, shape index: {}]
  %s1 = inlined_call_operand.vmem [shape: bf16[288,32], index: 1, kind: input, shape index: {}]
  %s2 = inlined_call_operand.vmem [shape: f32[1,32], index: 2, kind: input, shape index: {}]
  %s3 = inlined_call_operand.vmem [shape: bf16[32,32], index: 3, kind: output, shape index: {}]
  %s4 = sld [smem:[#allocation0]]
  $region22: #{centernet_inference.5} parent=0
    _
  %s6 = ssub.s32 1, %s4
  %s7 = scalar_select 0, %s6, %s4
  // Predicated region
  $region2: #{centernet_inference.5} parent=0 // pred_check
    _
  $region3: #{centernet_inference.5} parent=0 // pred_check_branch
    %9 = sbr.rel (0) target = $region5
  $region4: #{centernet_inference.5} parent=0 // pred_region
    _
  $region5: #{centernet_inference.5} parent=0 // pred_fallthru
    _
  // Predicated region
  $region6: #{centernet_inference.5} parent=0 // pred_check
    _
  $region7: #{centernet_inference.5} parent=0 // pred_check_branch
    %11 = sbr.rel (0) target = $region9
  $region8: #{centernet_inference.5} parent=0 // pred_region
    _
  $region9: #{centernet_inference.5} parent=0 // pred_fallthru
    _
  // Predicated region
  $region10: #{centernet_inference.5} parent=0 // pred_check
    _
  $region11: #{centernet_inference.5} parent=0 // pred_check_branch
    %13 = sbr.rel (0) target = $region13
  $region12: #{centernet_inference.5} parent=0 // pred_region
    _
  $region13: #{centernet_inference.5} parent=0 // pred_fallthru
    _
  %v15 = vld [vmem:[%s0] sm:$0xff]
  %v16 = vld [vmem:[%s0 + $0x8] sm:$0xf]
  %v17 = vld [vmem:[%s0 + $0xc] sm:$0xff]
  %v18 = vld [vmem:[%s0 + $0x14] sm:$0xf]
  %v19 = vld [vmem:[%s0 + $0x18] sm:$0xff]
  %v20 = vld [vmem:[%s0 + $0x20] sm:$0xf]
  %v21 = vld [vmem:[%s0 + $0x24] sm:$0xff]
  %v22 = vld [vmem:[%s0 + $0x2c] sm:$0xf]
  %v23 = vld [vmem:[%s1] sm:$0xf]
  %v24 = vld [vmem:[%s1 + $0x4] sm:$0xf]
  %v25 = vld [vmem:[%s1 + $0x8] sm:$0xf]
  %v26 = vld [vmem:[%s1 + $0xc] sm:$0xf]
  %v27 = vld [vmem:[%s1 + $0x10] sm:$0xf]
  %v28 = vld [vmem:[%s1 + $0x14] sm:$0xf]
  %v29 = vld [vmem:[%s1 + $0x18] sm:$0xf]
  %v30 = vld [vmem:[%s1 + $0x1c] sm:$0xf]
  %v31 = vld [vmem:[%s1 + $0x20] sm:$0xf]
  %v32 = vld [vmem:[%s1 + $0x24] sm:$0xf]
  %v33 = vld [vmem:[%s1 + $0x28] sm:$0xf]
  %v34 = vld [vmem:[%s1 + $0x2c] sm:$0xf]
  %v35 = vld [vmem:[%s1 + $0x30] sm:$0xf]
  %v36 = vld [vmem:[%s1 + $0x34] sm:$0xf]
  %v37 = vld [vmem:[%s1 + $0x38] sm:$0xf]
  %v38 = vld [vmem:[%s1 + $0x3c] sm:$0xf]
  %v39 = vld [vmem:[%s1 + $0x40] sm:$0xf]
  %v40 = vld [vmem:[%s1 + $0x44] sm:$0xf]
  %v41 = vld [vmem:[%s1 + $0x48] sm:$0xf]
  %v42 = vld [vmem:[%s1 + $0x4c] sm:$0xf]
  %v43 = vld [vmem:[%s1 + $0x50] sm:$0xf]
  %v44 = vld [vmem:[%s1 + $0x54] sm:$0xf]
  %v45 = vld [vmem:[%s1 + $0x58] sm:$0xf]
  %v46 = vld [vmem:[%s1 + $0x5c] sm:$0xf]
  %v47 = vld [vmem:[%s1 + $0x60] sm:$0xf]
  %v48 = vld [vmem:[%s1 + $0x64] sm:$0xf]
  %v49 = vld [vmem:[%s1 + $0x68] sm:$0xf]
  %v50 = vld [vmem:[%s1 + $0x6c] sm:$0xf]
  %v51 = vld [vmem:[%s1 + $0x70] sm:$0xf]
  %v52 = vld [vmem:[%s1 + $0x74] sm:$0xf]
  %v53 = vld [vmem:[%s1 + $0x78] sm:$0xf]
  %v54 = vld [vmem:[%s1 + $0x7c] sm:$0xf]
  %v55 = vld [vmem:[%s1 + $0x80] sm:$0xf]
  %v56 = vld [vmem:[%s1 + $0x84] sm:$0xf]
  %v57 = vld [vmem:[%s1 + $0x88] sm:$0xf]
  %v58 = vld [vmem:[%s1 + $0x8c] sm:$0xf]
  %v59 = vld [vmem:[%s2] sm:$0x1]
  %v61 = vlaneseq
  %v62 = vshrl.u32 %v61, 7
  %v63 = vsub.s32 0, %v62
  %v64 = vrot.slane %v59, %v63
  %v74 = vunpack.c.l.b16 %v15
  %v75 = vunpack.c.h.b16 %v15
  %v76 = vunpack.c.l.b16 %v16
  %v77 = vunpack.c.l.b16 %v17
  %v78 = vunpack.c.h.b16 %v17
  %v79 = vunpack.c.l.b16 %v18
  %v80 = vunpack.c.l.b16 %v19
  %v81 = vunpack.c.h.b16 %v19
  %v82 = vunpack.c.l.b16 %v20
  %v83 = vunpack.c.l.b16 %v21
  %v84 = vunpack.c.h.b16 %v21
  %v85 = vunpack.c.l.b16 %v22
  %v86 = vpack.c.b16 %v77, %v74
  %v87 = vpack.c.b16 %v78, %v75
  %v88 = vpack.c.b16 %v79, %v76
  %v89 = vpack.c.b16 %v83, %v80
  %v90 = vpack.c.b16 %v84, %v81
  %v91 = vpack.c.b16 %v85, %v82
  %v132 = vunpack.c.l.b16 %v23
  %v133 = vunpack.c.l.b16 %v24
  %v134 = vunpack.c.l.b16 %v25
  %v135 = vunpack.c.l.b16 %v26
  %v136 = vunpack.c.l.b16 %v27
  %v137 = vunpack.c.l.b16 %v28
  %v138 = vunpack.c.l.b16 %v29
  %v139 = vunpack.c.l.b16 %v30
  %v140 = vunpack.c.l.b16 %v31
  %v141 = vunpack.c.l.b16 %v32
  %v142 = vunpack.c.l.b16 %v33
  %v143 = vunpack.c.l.b16 %v34
  %v144 = vunpack.c.l.b16 %v35
  %v145 = vunpack.c.l.b16 %v36
  %v146 = vunpack.c.l.b16 %v37
  %v147 = vunpack.c.l.b16 %v38
  %v148 = vunpack.c.l.b16 %v39
  %v149 = vunpack.c.l.b16 %v40
  %v150 = vunpack.c.l.b16 %v41
  %v151 = vunpack.c.l.b16 %v42
  %v152 = vunpack.c.l.b16 %v43
  %v153 = vunpack.c.l.b16 %v44
  %v154 = vunpack.c.l.b16 %v45
  %v155 = vunpack.c.l.b16 %v46
  %v156 = vunpack.c.l.b16 %v47
  %v157 = vunpack.c.l.b16 %v48
  %v158 = vunpack.c.l.b16 %v49
  %v159 = vunpack.c.l.b16 %v50
  %v160 = vunpack.c.l.b16 %v51
  %v161 = vunpack.c.l.b16 %v52
  %v162 = vunpack.c.l.b16 %v53
  %v163 = vunpack.c.l.b16 %v54
  %v164 = vunpack.c.l.b16 %v55
  %v165 = vunpack.c.l.b16 %v56
  %v166 = vunpack.c.l.b16 %v57
  %v167 = vunpack.c.l.b16 %v58
  %v168 = vpack.c.b16 %v133, %v132
  %v169 = vpack.c.b16 %v135, %v134
  %v170 = vpack.c.b16 %v137, %v136
  %v171 = vpack.c.b16 %v139, %v138
  %v172 = vpack.c.b16 %v141, %v140
  %v173 = vpack.c.b16 %v143, %v142
  %v174 = vpack.c.b16 %v145, %v144
  %v175 = vpack.c.b16 %v147, %v146
  %v176 = vpack.c.b16 %v149, %v148
  %v177 = vpack.c.b16 %v151, %v150
  %v178 = vpack.c.b16 %v153, %v152
  %v179 = vpack.c.b16 %v155, %v154
  %v180 = vpack.c.b16 %v157, %v156
  %v181 = vpack.c.b16 %v159, %v158
  %v182 = vpack.c.b16 %v161, %v160
  %v183 = vpack.c.b16 %v163, %v162
  %v184 = vpack.c.b16 %v165, %v164
  %v185 = vpack.c.b16 %v167, %v166
  %vm204 = vcmask 261120
  %v206 = vsel %vm204, %v88, 0
  %v209 = vsel %vm204, %v91, 0
  %211 = vmatprep.subr.bf16.mxu0 0
  %212 = vmatpush1.bf16.msra.mxu0 %v175
  %213 = vmatprep.subr.bf16.mxu0 0
  %214 = vmatpush1.bf16.msra.mxu0 %v174
  %215 = vmatprep.subr.bf16.mxu0 0
  %216 = vmatpush1.bf16.msra.mxu0 %v173
  %217 = vmatprep.subr.bf16.mxu0 0
  %218 = vmatpush1.bf16.msra.mxu0 %v172
  %219 = vmatprep.subr.bf16.mxu0 0
  %220 = vmatpush1.bf16.msra.mxu0 %v171
  %221 = vmatprep.subr.bf16.mxu0 0
  %222 = vmatpush1.bf16.msra.mxu0 %v170
  %223 = vmatprep.subr.bf16.mxu0 0
  %224 = vmatpush1.bf16.msra.mxu0 %v169
  %225 = vmatprep.subr.bf16.mxu0 0
  %226 = vmatpush1.bf16.msra.mxu0 %v168
  %227 = vmatprep.subr.bf16.mxu0 0
  %228 = vmatpush2.bf16.msra.mxu0 %v183
  %229 = vmatprep.subr.bf16.mxu0 0
  %230 = vmatpush2.bf16.msra.mxu0 %v182
  %231 = vmatprep.subr.bf16.mxu0 0
  %232 = vmatpush2.bf16.msra.mxu0 %v181
  %233 = vmatprep.subr.bf16.mxu0 0
  %234 = vmatpush2.bf16.msra.mxu0 %v180
  %235 = vmatprep.subr.bf16.mxu0 0
  %236 = vmatpush2.bf16.msra.mxu0 %v179
  %237 = vmatprep.subr.bf16.mxu0 0
  %238 = vmatpush2.bf16.msra.mxu0 %v178
  %239 = vmatprep.subr.bf16.mxu0 0
  %240 = vmatpush2.bf16.msra.mxu0 %v177
  %241 = vmatprep.subr.bf16.mxu0 0
  %242 = vmatpush2.bf16.msra.mxu0 %v176
  %243 = vmatprep.mubr.bf16.mxu0 %v87
  %244 = vmatmul.mubr.bf16.gmra.mxu0 %v86
  %v245 = vpop.f32.mrf.mxu0
  %v246 = vadd.f32 %v64, %v245
  %v247 = vpop.f32.mrf.mxu0
  %v248 = vpop.f32.mrf.mxu0
  %v249 = vadd.f32 %v64, %v248
  %v250 = vpop.f32.mrf.mxu0
  %251 = vmatprep.mubr.bf16.mxu0 %v90
  %252 = vmatmul.mubr.bf16.gmra.mxu0 %v89
  %v253 = vpop.f32.mrf.mxu0
  %v254 = vadd.f32 %v64, %v253
  %v255 = vpop.f32.mrf.mxu0
  %v256 = vpop.f32.mrf.mxu0
  %v257 = vadd.f32 %v64, %v256
  %v258 = vpop.f32.mrf.mxu0
  %259 = vdwg.mxu0
  %260 = vmatprep.subr.bf16.mxu0 0
  %261 = vmatpush1.bf16.msra.mxu0 0
  %262 = vmatprep.subr.bf16.mxu0 0
  %263 = vmatpush1.bf16.msra.mxu0 0
  %264 = vmatprep.subr.bf16.mxu0 0
  %265 = vmatpush1.bf16.msra.mxu0 0
  %266 = vmatprep.subr.bf16.mxu0 0
  %267 = vmatpush1.bf16.msra.mxu0 0
  %268 = vmatprep.subr.bf16.mxu0 0
  %269 = vmatpush1.bf16.msra.mxu0 0
  %270 = vmatprep.subr.bf16.mxu0 0
  %271 = vmatpush1.bf16.msra.mxu0 0
  %272 = vmatprep.subr.bf16.mxu0 0
  %273 = vmatpush1.bf16.msra.mxu0 %v185
  %274 = vmatprep.subr.bf16.mxu0 0
  %275 = vmatpush1.bf16.msra.mxu0 %v184
  %276 = vmatprep.subr.bf16.mxu0 0
  %277 = vmatpush2.bf16.msra.mxu0 0
  %278 = vmatprep.subr.bf16.mxu0 0
  %279 = vmatpush2.bf16.msra.mxu0 0
  %280 = vmatprep.subr.bf16.mxu0 0
  %281 = vmatpush2.bf16.msra.mxu0 0
  %282 = vmatprep.subr.bf16.mxu0 0
  %283 = vmatpush2.bf16.msra.mxu0 0
  %284 = vmatprep.subr.bf16.mxu0 0
  %285 = vmatpush2.bf16.msra.mxu0 0
  %286 = vmatprep.subr.bf16.mxu0 0
  %287 = vmatpush2.bf16.msra.mxu0 0
  %288 = vmatprep.subr.bf16.mxu0 0
  %289 = vmatpush2.bf16.msra.mxu0 0
  %290 = vmatprep.subr.bf16.mxu0 0
  %291 = vmatpush2.bf16.msra.mxu0 0
  %292 = vmatprep.mubr.bf16.mxu0 0
  %293 = vmatmul.mubr.bf16.gmra.mxu0 %v206
  %v294 = vpop.f32.mrf.mxu0
  %v295 = vadd.f32 %v246, %v294
  %v296 = vpop.f32.mrf.mxu0
  %v297 = vpop.f32.mrf.mxu0
  %v298 = vadd.f32 %v249, %v297
  %v299 = vpop.f32.mrf.mxu0
  %300 = vmatprep.mubr.bf16.mxu0 0
  %301 = vmatmul.mubr.bf16.gmra.mxu0 %v209
  %v302 = vpop.f32.mrf.mxu0
  %v303 = vadd.f32 %v254, %v302
  %v304 = vpop.f32.mrf.mxu0
  %v305 = vpop.f32.mrf.mxu0
  %v306 = vadd.f32 %v257, %v305
  %v307 = vpop.f32.mrf.mxu0
  %308 = vdwg.mxu0
  %v309 = vmax.f32 %v295, 0.0
  %v310 = vmax.f32 %v298, 0.0
  %v311 = vmax.f32 %v303, 0.0
  %v312 = vmax.f32 %v306, 0.0
  %v313 = vpack.c.bf16 %v310, %v309
  %v314 = vpack.c.bf16 %v312, %v311
  %v317 = vunpack.c.l.b16 %v313
  %v318 = vunpack.c.h.b16 %v313
  %v319 = vunpack.c.l.b16 %v314
  %v320 = vunpack.c.h.b16 %v314
  %v321 = vpack.c.b16 %v317, %v317
  %v322 = vpack.c.b16 %v318, %v318
  %v323 = vpack.c.b16 %v319, %v319
  %v324 = vpack.c.b16 %v320, %v320
  %vm329 = vcmask 257024
  %330 = vst.msk [vmem:[%s3] sm:$0xf] %vm329, %v321
  %331 = vst.msk [vmem:[%s3 + $0x4] sm:$0xf] %vm329, %v322
  %332 = vst.msk [vmem:[%s3 + $0x8] sm:$0xf] %vm329, %v323
  %333 = vst.msk [vmem:[%s3 + $0xc] sm:$0xf] %vm329, %v324
  // Predicated region
  $region14: #{centernet_inference.5} parent=0 // pred_check
    _
  $region15: #{centernet_inference.5} parent=0 // pred_check_branch
    %335 = sbr.rel (0) target = $region17
  $region16: #{centernet_inference.5} parent=0 // pred_region
    _
  $region17: #{centernet_inference.5} parent=0 // pred_fallthru
    _
  // Predicated region
  $region18: #{centernet_inference.5} parent=0 // pred_check
    _
  $region19: #{centernet_inference.5} parent=0 // pred_check_branch
    %337 = sbr.rel (0) target = $region21
  $region20: #{centernet_inference.5} parent=0 // pred_region
    _
  $region21: #{centernet_inference.5} parent=0 // pred_fallthru
    _

// kernel: centernet_inference.7
$region0: #{centernet_inference.7}
  #allocation0 [shape = 'u32[]', space=smem, size = 0x4, offset = 0x4, fixed_abs, tag = 'smem constant byte address 0x4 - core index']
  #allocation1 [shape = 'u32[144,128]{1,0:T(1,128)}', space=vmem, size = 0x12000, scoped, tag = 'internal scratch']
  %s0 = inlined_call_operand.vmem [shape: f32[2,52,4], index: 0, kind: input, shape index: {}]
  %s1 = inlined_call_operand.vmem [shape: f32[2,24,4], index: 1, kind: output, shape index: {}]
  %s2 = sld [smem:[#allocation0]]
  $region37: #{centernet_inference.7} parent=0
    _
  %s4 = ssub.s32 1, %s2
  %s5 = scalar_select 0, %s4, %s2
  loop: start=0, step=1, limit=4
  $region2: #{centernet_inference.7} parent=0 // loop_pre_header
    _
  $region3: #{centernet_inference.7} parent=0 // loop_header
    %s7 = sphi 0, %s11
    %p8 = scmp.ge.s32.totalorder %s7, 4
    %s17 = sphi 0, %s19
    %s20 = sphi 0, %s17
    %s21 = sphi 0, %s20
    %s37 = sphi 0, %s21
    %s43 = sphi 0, %s45
    %s46 = sphi 0, %s43
    %s47 = sphi 0, %s46
    %s63 = sphi 0, %s47
  $region4: #{centernet_inference.7} parent=0 // loop_header_branch
    %10 = sbr.rel (%p8) target = $region8
  $region5: #{centernet_inference.7} parent=0 // loop_body
    %s12 = ssub.s32 %s7, 1
    %s13 = ssub.s32 %s7, 2
    %s14 = sadd.s32 %s7, 1
    %s15 = ssub.s32 %s7, %s14
    %p16 = scmp.eq.s32.totalorder %s15, 0
    %s18 = sadd.s32 %s17, 1
    %s19 = scalar_select %p16, %s17, %s18
    %p22 = pneg %p16
    %p23 = scmp.eq.s32.totalorder %s7, 1
    %p24 = por %p22, %p23
    %p25 = scmp.ne.s32.totalorder %s17, %s20
    %p26 = scmp.eq.s32.totalorder %s7, 0
    %p27 = por %p25, %p26
    %p28 = scmp.ne.s32.totalorder %s17, %s20
    %p29 = scmp.eq.s32.totalorder %s12, 1
    %p30 = por %p28, %p29
    %p31 = scmp.ne.s32.totalorder %s20, %s21
    %p32 = scmp.eq.s32.totalorder %s12, 0
    %p33 = por %p31, %p32
    %p34 = scmp.ne.s32.totalorder %s20, %s21
    %p35 = scmp.eq.s32.totalorder %s13, 1
    %p36 = por %p34, %p35
    %p38 = scmp.ne.s32.totalorder %s21, %s37
    %p39 = scmp.eq.s32.totalorder %s13, 0
    %p40 = por %p38, %p39
    %s41 = ssub.s32 %s7, %s14
    %p42 = scmp.eq.s32.totalorder %s41, 0
    %s44 = sadd.s32 %s43, 1
    %s45 = scalar_select %p42, %s43, %s44
    %p48 = pneg %p42
    %p49 = scmp.eq.s32.totalorder %s7, 1
    %p50 = por %p48, %p49
    %p51 = scmp.ne.s32.totalorder %s43, %s46
    %p52 = scmp.eq.s32.totalorder %s7, 0
    %p53 = por %p51, %p52
    %p54 = scmp.ne.s32.totalorder %s43, %s46
    %p55 = scmp.eq.s32.totalorder %s12, 1
    %p56 = por %p54, %p55
    %p57 = scmp.ne.s32.totalorder %s46, %s47
    %p58 = scmp.eq.s32.totalorder %s12, 0
    %p59 = por %p57, %p58
    %p60 = scmp.ne.s32.totalorder %s46, %s47
    %p61 = scmp.eq.s32.totalorder %s13, 1
    %p62 = por %p60, %p61
    %p64 = scmp.ne.s32.totalorder %s47, %s63
    %p65 = scmp.eq.s32.totalorder %s13, 0
    %p66 = por %p64, %p65
    %p67 = scmp.le.s32.totalorder 1, %s7
    %p68 = scmp.lt.s32.totalorder %s7, 3
    %p69 = pnand %p67, %p68
    %p70 = pneg %p69
    // Predicated region
    $region9: #{centernet_inference.7} parent=5 // pred_check
      _
    $region10: #{centernet_inference.7} parent=5 // pred_check_branch
      %72 = sbr.rel (%p69) target = $region12
    $region11: #{centernet_inference.7} parent=5 // pred_region
      %s73 = ssub.s32 %s7, 1
    $region12: #{centernet_inference.7} parent=5 // pred_fallthru
      _
    %p74 = scmp.lt.s32.totalorder %s7, 2
    // Predicated region
    $region13: #{centernet_inference.7} parent=5 // pred_check
      %p75 = pneg %p74
    $region14: #{centernet_inference.7} parent=5 // pred_check_branch
      %77 = sbr.rel (%p75) target = $region16
    $region15: #{centernet_inference.7} parent=5 // pred_region
      // Predicated region
      $region17: #{centernet_inference.7} parent=15 // pred_check
        %p78 = pneg %p27
      $region18: #{centernet_inference.7} parent=15 // pred_check_branch
        %80 = sbr.rel (%p78) target = $region20
      $region19: #{centernet_inference.7} parent=15 // pred_region
        %p81 = scmp.lt.s32.totalorder %s7, 1
        %s82 = scalar_select %p81, %s7, 1
        %s83 = smul.addr %s82, 7
        %s84 = smul.addr %s83, 8
        %s85 = scalar_lea.vmem %s0, %s84
      $region20: #{centernet_inference.7} parent=15 // pred_fallthru
        _
    $region16: #{centernet_inference.7} parent=5 // pred_fallthru
      _
    %p86 = scmp.le.s32.totalorder 1, %s7
    %p87 = scmp.lt.s32.totalorder %s7, 3
    %p88 = pnand %p86, %p87
    %p89 = pneg %p88
    // Predicated region
    $region21: #{centernet_inference.7} parent=5 // pred_check
      _
    $region22: #{centernet_inference.7} parent=5 // pred_check_branch
      %91 = sbr.rel (%p88) target = $region24
    $region23: #{centernet_inference.7} parent=5 // pred_region
      %s92 = ssub.s32 %s7, 1
      %p93 = scmp.lt.s32.totalorder %s12, 1
      %s94 = scalar_select %p93, %s12, 1
      %s95 = smul.addr %s94, 7
      %s96 = smul.addr %s95, 8
      %s97 = scalar_lea.vmem %s0, %s96
      %p98 = pneg %p33
      %p99 = pneg %p30
      %p100 = pneg %p59
      %p101 = pneg %p56
      %p102 = scmp.lt.s32.totalorder %s12, 1
      %s103 = scalar_select %p102, %s12, 1
      %s104 = smul.addr %s103, 3
      %s105 = smul.addr %s104, 8
      %s106 = scalar_lea.vmem %s1, %s105
      %p107 = scmp.lt.s32.totalorder %s12, 1
      %s108 = scalar_select %p107, %s12, 1
      %s109 = smul.addr %s108, 7
      %s110 = smul.addr %s109, 8
      %s111 = scalar_lea.vmem %s0, %s110
      %p112 = scmp.lt.s32.totalorder %s12, 1
      %s113 = scalar_select %p112, %s12, 1
      %s114 = smul.addr %s113, 3
      %s115 = smul.addr %s114, 8
      %s116 = scalar_lea.vmem %s1, %s115
      %v117 = vld [vmem:[%s111 + $0xe] sm:$0xff]
      %v118 = vld [vmem:[%s111 + $0x16] sm:$0xff]
      %v119 = vld [vmem:[%s111 + $0x1e] sm:$0xff]
      %v120 = vld [vmem:[%s111 + $0x7] sm:$0xff]
      %v121 = vld [vmem:[%s111 + $0xf] sm:$0xff]
      %v122 = vld [vmem:[%s111 + $0x17] sm:$0xff]
      %v123 = vmax.f32 %v117, %v120
      %v124 = vmax.f32 %v118, %v121
      %v125 = vmax.f32 %v119, %v122
      %v126 = vld [vmem:[%s111 + $0x8] sm:$0xff]
      %v127 = vld [vmem:[%s111 + $0x10] sm:$0xff]
      %v128 = vld [vmem:[%s111 + $0x18] sm:$0xff]
      %v129 = vmax.f32 %v123, %v126
      %v130 = vmax.f32 %v124, %v127
      %v131 = vmax.f32 %v125, %v128
      %v132 = vld [vmem:[%s111 + $0x9] sm:$0xff]
      %v133 = vld [vmem:[%s111 + $0x11] sm:$0xff]
      %v134 = vld [vmem:[%s111 + $0x19] sm:$0xff]
      %v135 = vmax.f32 %v129, %v132
      %v136 = vmax.f32 %v130, %v133
      %v137 = vmax.f32 %v131, %v134
      %v138 = vld [vmem:[%s111 + $0xd] sm:$0xff]
      %v139 = vld [vmem:[%s111 + $0x15] sm:$0xff]
      %v140 = vld [vmem:[%s111 + $0x1d] sm:$0xff]
      %v141 = vmax.f32 %v135, %v138
      %v142 = vmax.f32 %v136, %v139
      %v143 = vmax.f32 %v137, %v140
      %v144 = vld [vmem:[%s111 + $0x1f] sm:$0xff]
      %v145 = vmax.f32 %v141, %v121
      %v146 = vmax.f32 %v142, %v122
      %v147 = vmax.f32 %v143, %v144
      %v148 = vld [vmem:[%s111 + $0x13] sm:$0xff]
      %v149 = vld [vmem:[%s111 + $0x1b] sm:$0xff]
      %v150 = vld [vmem:[%s111 + $0x23] sm:$0xff]
      %v151 = vmax.f32 %v145, %v148
      %v152 = vmax.f32 %v146, %v149
      %v153 = vmax.f32 %v147, %v150
      %v154 = vld [vmem:[%s111 + $0x14] sm:$0xff]
      %v155 = vld [vmem:[%s111 + $0x1c] sm:$0xff]
      %v156 = vld [vmem:[%s111 + $0x24] sm:$0xff]
      %v157 = vmax.f32 %v151, %v154
      %v158 = vmax.f32 %v152, %v155
      %v159 = vmax.f32 %v153, %v156
      %v160 = vld [vmem:[%s111 + $0x25] sm:$0xff]
      %v161 = vmax.f32 %v157, %v139
      %v162 = vmax.f32 %v158, %v140
      %v163 = vmax.f32 %v159, %v160
      %vm164 = vcmp.ge.f32.partialorder %v117, %v161
      %vm165 = vcmp.ge.f32.partialorder %v118, %v162
      %vm166 = vcmp.ge.f32.partialorder %v119, %v163
      %v167 = vsel %vm164, %v117, 0.0
      %v168 = vsel %vm165, %v118, 0.0
      %v169 = vsel %vm166, %v119, 0.0
      %vm170 = vcmask 31744
      %171 = vst.msk [vmem:[%s116] sm:$0xff] %vm170, %v167
      %172 = vst.msk [vmem:[%s116 + $0x8] sm:$0xff] %vm170, %v168
      %173 = vst.msk [vmem:[%s116 + $0x10] sm:$0xff] %vm170, %v169
      %p174 = scmp.lt.s32.totalorder %s12, 1
      %s175 = scalar_select %p174, %s12, 1
      %s176 = smul.addr %s175, 3
      %s177 = smul.addr %s176, 8
      %s178 = scalar_lea.vmem %s1, %s177
      // Predicated region
      $region25: #{centernet_inference.7} parent=23 // pred_check
        %p179 = pneg %p56
      $region26: #{centernet_inference.7} parent=23 // pred_check_branch
        %181 = sbr.rel (%p179) target = $region28
      $region27: #{centernet_inference.7} parent=23 // pred_region
        _
      $region28: #{centernet_inference.7} parent=23 // pred_fallthru
        _
    $region24: #{centernet_inference.7} parent=5 // pred_fallthru
      _
    %p182 = scmp.le.s32.totalorder 2, %s7
    // Predicated region
    $region29: #{centernet_inference.7} parent=5 // pred_check
      %p183 = pneg %p182
    $region30: #{centernet_inference.7} parent=5 // pred_check_branch
      %185 = sbr.rel (%p183) target = $region32
    $region31: #{centernet_inference.7} parent=5 // pred_region
      %s186 = ssub.s32 %s7, 2
      // Predicated region
      $region33: #{centernet_inference.7} parent=31 // pred_check
        %p187 = pneg %p62
      $region34: #{centernet_inference.7} parent=31 // pred_check_branch
        %189 = sbr.rel (%p187) target = $region36
      $region35: #{centernet_inference.7} parent=31 // pred_region
        %p190 = scmp.lt.s32.totalorder %s13, 1
        %s191 = scalar_select %p190, %s13, 1
        %s192 = smul.addr %s191, 3
        %s193 = smul.addr %s192, 8
        %s194 = scalar_lea.vmem %s1, %s193
      $region36: #{centernet_inference.7} parent=31 // pred_fallthru
        _
    $region32: #{centernet_inference.7} parent=5 // pred_fallthru
      _
  $region6: #{centernet_inference.7} parent=0 // loop_footer
    %s11 = sadd.s32 1, %s7
  $region7: #{centernet_inference.7} parent=0 // loop_footer_branch
    %6 = sbr.rel target = $region3
  $region8: #{centernet_inference.7} parent=0 // loop_exit
    _

// kernel: centernet_inference.6
$region0: #{centernet_inference.6}
  #allocation0 [shape = 'u32[]', space=smem, size = 0x4, offset = 0x4, fixed_abs, tag = 'smem constant byte address 0x4 - core index']
  #allocation1 [shape = 'u32[144,128]{1,0:T(1,128)}', space=vmem, size = 0x12000, scoped, tag = 'internal scratch']
  %s0 = inlined_call_operand.vmem [shape: bf16[2,1,44,32], index: 0, kind: input, shape index: {}]
  %s1 = inlined_call_operand.vmem [shape: bf16[288,96], index: 1, kind: input, shape index: {}]
  %s2 = inlined_call_operand.vmem [shape: f32[1,96], index: 2, kind: input, shape index: {}]
  %s3 = inlined_call_operand.vmem [shape: bf16[96,128], index: 3, kind: input, shape index: {}]
  %s4 = inlined_call_operand.vmem [shape: f32[1,128], index: 4, kind: input, shape index: {}]
  %s5 = inlined_call_operand.vmem [shape: f32[24,1], index: 5, kind: input, shape index: {}]
  %s6 = inlined_call_operand.vmem [shape: f32[2,1,24,128], index: 6, kind: output, shape index: {}]
  %s7 = sld [smem:[#allocation0]]
  $region57: #{centernet_inference.6} parent=0
    _
  %s9 = ssub.s32 1, %s7
  %s10 = scalar_select 0, %s9, %s7
  loop: start=0, step=1, limit=4
  $region2: #{centernet_inference.6} parent=0 // loop_pre_header
    _
  $region3: #{centernet_inference.6} parent=0 // loop_header
    %s12 = sphi 0, %s16
    %p13 = scmp.ge.s32.totalorder %s12, 4
    %s19 = sphi 0, %s31
    %s20 = sphi 0, %s27
    %s21 = sphi 0, %s19
    %s22 = sphi 0, %s20
    %s23 = sphi 0, %s21
    %s24 = sphi 0, %s22
    %s36 = sphi 0, %s38
    %s39 = sphi 0, %s36
    %s40 = sphi 0, %s39
    %s56 = sphi 0, %s40
    %s60 = sphi 0, %s60
    %s62 = sphi 0, %s60
    %s63 = sphi 0, %s62
    %s77 = sphi 0, %s63
    %s81 = sphi 0, %s81
    %s83 = sphi 0, %s81
    %s84 = sphi 0, %s83
    %s98 = sphi 0, %s84
    %s102 = sphi 0, %s102
    %s104 = sphi 0, %s102
    %s105 = sphi 0, %s104
    %s119 = sphi 0, %s105
    %s123 = sphi 0, %s123
    %s125 = sphi 0, %s123
    %s126 = sphi 0, %s125
    %s140 = sphi 0, %s126
    %s144 = sphi 0, %s144
    %s146 = sphi 0, %s144
    %s147 = sphi 0, %s146
    %s161 = sphi 0, %s147
    %s169 = sphi 0, %s171
    %s172 = sphi 0, %s169
    %s173 = sphi 0, %s172
    %s189 = sphi 0, %s173
  $region4: #{centernet_inference.6} parent=0 // loop_header_branch
    %15 = sbr.rel (%p13) target = $region8
  $region5: #{centernet_inference.6} parent=0 // loop_body
    %s17 = ssub.s32 %s12, 1
    %s18 = ssub.s32 %s12, 2
    %s25 = sadd.s32 1, %s20
    %p26 = scmp.ge.s32.totalorder %s25, 1
    %s27 = scalar_select %p26, 0, %s25
    %s28 = sadd.s32 1, %s19
    %s29 = scalar_select %p26, %s28, %s19
    %p30 = scmp.ge.s32.totalorder %s29, 2
    %s31 = scalar_select %p30, 0, %s29
    %s32 = ssub.s32 %s19, %s31
    %s33 = ssub.s32 %s20, %s27
    %s34 = sor.u32 %s32, %s33
    %p35 = scmp.eq.s32.totalorder %s34, 0
    %s37 = sadd.s32 %s36, 1
    %s38 = scalar_select %p35, %s36, %s37
    %p41 = pneg %p35
    %p42 = scmp.eq.s32.totalorder %s12, 1
    %p43 = por %p41, %p42
    %p44 = scmp.ne.s32.totalorder %s36, %s39
    %p45 = scmp.eq.s32.totalorder %s12, 0
    %p46 = por %p44, %p45
    %p47 = scmp.ne.s32.totalorder %s36, %s39
    %p48 = scmp.eq.s32.totalorder %s17, 1
    %p49 = por %p47, %p48
    %p50 = scmp.ne.s32.totalorder %s39, %s40
    %p51 = scmp.eq.s32.totalorder %s17, 0
    %p52 = por %p50, %p51
    %p53 = scmp.ne.s32.totalorder %s39, %s40
    %p54 = scmp.eq.s32.totalorder %s18, 1
    %p55 = por %p53, %p54
    %p57 = scmp.ne.s32.totalorder %s40, %s56
    %p58 = scmp.eq.s32.totalorder %s18, 0
    %p59 = por %p57, %p58
    %s61 = sadd.s32 %s60, 1
    %p64 = scmp.eq.s32.totalorder %s12, 1
    %p65 = scmp.ne.s32.totalorder %s60, %s62
    %p66 = scmp.eq.s32.totalorder %s12, 0
    %p67 = por %p65, %p66
    %p68 = scmp.ne.s32.totalorder %s60, %s62
    %p69 = scmp.eq.s32.totalorder %s17, 1
    %p70 = por %p68, %p69
    %p71 = scmp.ne.s32.totalorder %s62, %s63
    %p72 = scmp.eq.s32.totalorder %s17, 0
    %p73 = por %p71, %p72
    %p74 = scmp.ne.s32.totalorder %s62, %s63
    %p75 = scmp.eq.s32.totalorder %s18, 1
    %p76 = por %p74, %p75
    %p78 = scmp.ne.s32.totalorder %s63, %s77
    %p79 = scmp.eq.s32.totalorder %s18, 0
    %p80 = por %p78, %p79
    %s82 = sadd.s32 %s81, 1
    %p85 = scmp.eq.s32.totalorder %s12, 1
    %p86 = scmp.ne.s32.totalorder %s81, %s83
    %p87 = scmp.eq.s32.totalorder %s12, 0
    %p88 = por %p86, %p87
    %p89 = scmp.ne.s32.totalorder %s81, %s83
    %p90 = scmp.eq.s32.totalorder %s17, 1
    %p91 = por %p89, %p90
    %p92 = scmp.ne.s32.totalorder %s83, %s84
    %p93 = scmp.eq.s32.totalorder %s17, 0
    %p94 = por %p92, %p93
    %p95 = scmp.ne.s32.totalorder %s83, %s84
    %p96 = scmp.eq.s32.totalorder %s18, 1
    %p97 = por %p95, %p96
    %p99 = scmp.ne.s32.totalorder %s84, %s98
    %p100 = scmp.eq.s32.totalorder %s18, 0
    %p101 = por %p99, %p100
    %s103 = sadd.s32 %s102, 1
    %p106 = scmp.eq.s32.totalorder %s12, 1
    %p107 = scmp.ne.s32.totalorder %s102, %s104
    %p108 = scmp.eq.s32.totalorder %s12, 0
    %p109 = por %p107, %p108
    %p110 = scmp.ne.s32.totalorder %s102, %s104
    %p111 = scmp.eq.s32.totalorder %s17, 1
    %p112 = por %p110, %p111
    %p113 = scmp.ne.s32.totalorder %s104, %s105
    %p114 = scmp.eq.s32.totalorder %s17, 0
    %p115 = por %p113, %p114
    %p116 = scmp.ne.s32.totalorder %s104, %s105
    %p117 = scmp.eq.s32.totalorder %s18, 1
    %p118 = por %p116, %p117
    %p120 = scmp.ne.s32.totalorder %s105, %s119
    %p121 = scmp.eq.s32.totalorder %s18, 0
    %p122 = por %p120, %p121
    %s124 = sadd.s32 %s123, 1
    %p127 = scmp.eq.s32.totalorder %s12, 1
    %p128 = scmp.ne.s32.totalorder %s123, %s125
    %p129 = scmp.eq.s32.totalorder %s12, 0
    %p130 = por %p128, %p129
    %p131 = scmp.ne.s32.totalorder %s123, %s125
    %p132 = scmp.eq.s32.totalorder %s17, 1
    %p133 = por %p131, %p132
    %p134 = scmp.ne.s32.totalorder %s125, %s126
    %p135 = scmp.eq.s32.totalorder %s17, 0
    %p136 = por %p134, %p135
    %p137 = scmp.ne.s32.totalorder %s125, %s126
    %p138 = scmp.eq.s32.totalorder %s18, 1
    %p139 = por %p137, %p138
    %p141 = scmp.ne.s32.totalorder %s126, %s140
    %p142 = scmp.eq.s32.totalorder %s18, 0
    %p143 = por %p141, %p142
    %s145 = sadd.s32 %s144, 1
    %p148 = scmp.eq.s32.totalorder %s12, 1
    %p149 = scmp.ne.s32.totalorder %s144, %s146
    %p150 = scmp.eq.s32.totalorder %s12, 0
    %p151 = por %p149, %p150
    %p152 = scmp.ne.s32.totalorder %s144, %s146
    %p153 = scmp.eq.s32.totalorder %s17, 1
    %p154 = por %p152, %p153
    %p155 = scmp.ne.s32.totalorder %s146, %s147
    %p156 = scmp.eq.s32.totalorder %s17, 0
    %p157 = por %p155, %p156
    %p158 = scmp.ne.s32.totalorder %s146, %s147
    %p159 = scmp.eq.s32.totalorder %s18, 1
    %p160 = por %p158, %p159
    %p162 = scmp.ne.s32.totalorder %s147, %s161
    %p163 = scmp.eq.s32.totalorder %s18, 0
    %p164 = por %p162, %p163
    %s165 = ssub.s32 %s19, %s31
    %s166 = ssub.s32 %s20, %s27
    %s167 = sor.u32 %s165, %s166
    %p168 = scmp.eq.s32.totalorder %s167, 0
    %s170 = sadd.s32 %s169, 1
    %s171 = scalar_select %p168, %s169, %s170
    %p174 = pneg %p168
    %p175 = scmp.eq.s32.totalorder %s12, 1
    %p176 = por %p174, %p175
    %p177 = scmp.ne.s32.totalorder %s169, %s172
    %p178 = scmp.eq.s32.totalorder %s12, 0
    %p179 = por %p177, %p178
    %p180 = scmp.ne.s32.totalorder %s169, %s172
    %p181 = scmp.eq.s32.totalorder %s17, 1
    %p182 = por %p180, %p181
    %p183 = scmp.ne.s32.totalorder %s172, %s173
    %p184 = scmp.eq.s32.totalorder %s17, 0
    %p185 = por %p183, %p184
    %p186 = scmp.ne.s32.totalorder %s172, %s173
    %p187 = scmp.eq.s32.totalorder %s18, 1
    %p188 = por %p186, %p187
    %p190 = scmp.ne.s32.totalorder %s173, %s189
    %p191 = scmp.eq.s32.totalorder %s18, 0
    %p192 = por %p190, %p191
    %p193 = scmp.le.s32.totalorder 1, %s12
    %p194 = scmp.lt.s32.totalorder %s12, 3
    %p195 = pnand %p193, %p194
    %p196 = pneg %p195
    // Predicated region
    $region9: #{centernet_inference.6} parent=5 // pred_check
      _
    $region10: #{centernet_inference.6} parent=5 // pred_check_branch
      %198 = sbr.rel (%p195) target = $region12
    $region11: #{centernet_inference.6} parent=5 // pred_region
      %s199 = ssub.s32 %s12, 1
      // Predicated region
      $region13: #{centernet_inference.6} parent=11 // pred_check
        %p200 = pneg %p73
      $region14: #{centernet_inference.6} parent=11 // pred_check_branch
        %202 = sbr.rel (%p200) target = $region16
      $region15: #{centernet_inference.6} parent=11 // pred_region
        _
      $region16: #{centernet_inference.6} parent=11 // pred_fallthru
        _
      // Predicated region
      $region17: #{centernet_inference.6} parent=11 // pred_check
        %p203 = pneg %p94
      $region18: #{centernet_inference.6} parent=11 // pred_check_branch
        %205 = sbr.rel (%p203) target = $region20
      $region19: #{centernet_inference.6} parent=11 // pred_region
        _
      $region20: #{centernet_inference.6} parent=11 // pred_fallthru
        _
      // Predicated region
      $region21: #{centernet_inference.6} parent=11 // pred_check
        %p206 = pneg %p115
      $region22: #{centernet_inference.6} parent=11 // pred_check_branch
        %208 = sbr.rel (%p206) target = $region24
      $region23: #{centernet_inference.6} parent=11 // pred_region
        _
      $region24: #{centernet_inference.6} parent=11 // pred_fallthru
        _
      // Predicated region
      $region25: #{centernet_inference.6} parent=11 // pred_check
        %p209 = pneg %p136
      $region26: #{centernet_inference.6} parent=11 // pred_check_branch
        %211 = sbr.rel (%p209) target = $region28
      $region27: #{centernet_inference.6} parent=11 // pred_region
        _
      $region28: #{centernet_inference.6} parent=11 // pred_fallthru
        _
      // Predicated region
      $region29: #{centernet_inference.6} parent=11 // pred_check
        %p212 = pneg %p157
      $region30: #{centernet_inference.6} parent=11 // pred_check_branch
        %214 = sbr.rel (%p212) target = $region32
      $region31: #{centernet_inference.6} parent=11 // pred_region
        _
      $region32: #{centernet_inference.6} parent=11 // pred_fallthru
        _
    $region12: #{centernet_inference.6} parent=5 // pred_fallthru
      _
    %p215 = scmp.lt.s32.totalorder %s12, 2
    // Predicated region
    $region33: #{centernet_inference.6} parent=5 // pred_check
      %p216 = pneg %p215
    $region34: #{centernet_inference.6} parent=5 // pred_check_branch
      %218 = sbr.rel (%p216) target = $region36
    $region35: #{centernet_inference.6} parent=5 // pred_region
      // Predicated region
      $region37: #{centernet_inference.6} parent=35 // pred_check
        %p219 = pneg %p46
      $region38: #{centernet_inference.6} parent=35 // pred_check_branch
        %221 = sbr.rel (%p219) target = $region40
      $region39: #{centernet_inference.6} parent=35 // pred_region
        %p222 = scmp.lt.s32.totalorder %s19, 1
        %s223 = scalar_select %p222, %s19, 1
        %p224 = scmp.lt.s32.totalorder %s20, 0
        %s225 = scalar_select %p224, %s20, 0
        %s226 = smul.addr %s225, 6
        %s227 = smul.addr %s223, 6
        %s228 = sadd.s32 %s226, %s227
        %s229 = smul.addr %s228, 4
        %s230 = scalar_lea.vmem %s0, %s229
      $region40: #{centernet_inference.6} parent=35 // pred_fallthru
        _
    $region36: #{centernet_inference.6} parent=5 // pred_fallthru
      _
    %p231 = scmp.le.s32.totalorder 1, %s12
    %p232 = scmp.lt.s32.totalorder %s12, 3
    %p233 = pnand %p231, %p232
    %p234 = pneg %p233
    // Predicated region
    $region41: #{centernet_inference.6} parent=5 // pred_check
      _
    $region42: #{centernet_inference.6} parent=5 // pred_check_branch
      %236 = sbr.rel (%p233) target = $region44
    $region43: #{centernet_inference.6} parent=5 // pred_region
      %s237 = ssub.s32 %s12, 1
      %p238 = scmp.lt.s32.totalorder %s21, 1
      %s239 = scalar_select %p238, %s21, 1
      %p240 = scmp.lt.s32.totalorder %s22, 0
      %s241 = scalar_select %p240, %s22, 0
      %s242 = smul.addr %s241, 6
      %s243 = smul.addr %s239, 6
      %s244 = sadd.s32 %s242, %s243
      %s245 = smul.addr %s244, 4
      %s246 = scalar_lea.vmem %s0, %s245
      %p247 = pneg %p52
      %p248 = pneg %p49
      %p249 = pneg %p73
      %p250 = pneg %p70
      %p251 = pneg %p94
      %p252 = pneg %p91
      %p253 = pneg %p115
      %p254 = pneg %p112
      %p255 = pneg %p136
      %p256 = pneg %p133
      %p257 = pneg %p157
      %p258 = pneg %p154
      %p259 = pneg %p185
      %p260 = pneg %p182
      %p261 = scmp.lt.s32.totalorder %s21, 1
      %s262 = scalar_select %p261, %s21, 1
      %p263 = scmp.lt.s32.totalorder %s22, 0
      %s264 = scalar_select %p263, %s22, 0
      %s265 = smul.addr %s264, 3
      %s266 = smul.addr %s262, 3
      %s267 = sadd.s32 %s265, %s266
      %s268 = smul.addr %s267, 8
      %s269 = scalar_lea.vmem %s6, %s268
      %p270 = scmp.lt.s32.totalorder %s21, 1
      %s271 = scalar_select %p270, %s21, 1
      %p272 = scmp.lt.s32.totalorder %s22, 0
      %s273 = scalar_select %p272, %s22, 0
      %s274 = smul.addr %s273, 6
      %s275 = smul.addr %s271, 6
      %s276 = sadd.s32 %s274, %s275
      %s277 = smul.addr %s276, 4
      %s278 = scalar_lea.vmem %s0, %s277
      %p279 = scmp.lt.s32.totalorder %s21, 1
      %s280 = scalar_select %p279, %s21, 1
      %p281 = scmp.lt.s32.totalorder %s22, 0
      %s282 = scalar_select %p281, %s22, 0
      %s283 = smul.addr %s282, 3
      %s284 = smul.addr %s280, 3
      %s285 = sadd.s32 %s283, %s284
      %s286 = smul.addr %s285, 8
      %s287 = scalar_lea.vmem %s6, %s286
      %v289 = vld [vmem:[%s278] sm:$0xf]
      %v290 = vld [vmem:[%s278 + $0x4] sm:$0xf]
      %v291 = vld [vmem:[%s278 + $0x8] sm:$0xf]
      %v292 = vld [vmem:[%s1] sm:$0xf]
      %v293 = vld [vmem:[%s1 + $0x4] sm:$0xf]
      %v294 = vld [vmem:[%s1 + $0x8] sm:$0xf]
      %v295 = vld [vmem:[%s1 + $0xc] sm:$0xf]
      %v296 = vld [vmem:[%s278 + $0xc] sm:$0x1]
      %v297 = vld [vmem:[%s1 + $0x10] sm:$0xf]
      %v298 = vld [vmem:[%s1 + $0x14] sm:$0xf]
      %v299 = vld [vmem:[%s1 + $0x18] sm:$0xf]
      %v300 = vld [vmem:[%s1 + $0x1c] sm:$0xf]
      %v305 = vunpack.c.l.b16 %v289
      %v306 = vunpack.c.l.b16 %v290
      %v307 = vunpack.c.l.b16 %v291
      %v308 = vunpack.c.l.b16 %v296
      %v309 = vpack.c.b16 %v306, %v305
      %v310 = vpack.c.b16 %v308, %v307
      %vm311 = vsmask.f32 7424
      %v313 = vshrl.u32 %v309, 16
      %v315 = vshll.u32 %v309, 16
      %v317 = vrot.slane %v315, 1
      %v318 = vor.u32 %v313, %v317
      %v320 = vshll.u32 %v310, 16
      %v322 = vrot.slane %v320, 1
      %v323 = vsel %vm311, %v318, %v322
      %v324 = vshrl.u32 %v310, 16
      %v326 = vor.u32 %v324, %v322
      %v331 = vunpack.c.l.b16 %v297
      %v332 = vunpack.c.l.b16 %v298
      %v333 = vunpack.c.l.b16 %v299
      %v334 = vunpack.c.l.b16 %v300
      %v335 = vpack.c.b16 %v332, %v331
      %v336 = vpack.c.b16 %v334, %v333
      %vm339 = vcmask 261120
      %v341 = vsel %vm339, %v323, 0
      %v344 = vsel %vm339, %v326, 0
      %346 = vmatprep.subr.bf16.mxu0 0
      %347 = vmatpush1.bf16.msra.mxu0 0
      %348 = vmatprep.subr.bf16.mxu0 0
      %349 = vmatpush1.bf16.msra.mxu0 0
      %350 = vmatprep.subr.bf16.mxu0 0
      %351 = vmatpush1.bf16.msra.mxu0 0
      %352 = vmatprep.subr.bf16.mxu0 0
      %353 = vmatpush1.bf16.msra.mxu0 0
      %354 = vmatprep.subr.bf16.mxu0 0
      %355 = vmatpush1.bf16.msra.mxu0 0
      %356 = vmatprep.subr.bf16.mxu0 0
      %357 = vmatpush1.bf16.msra.mxu0 0
      %358 = vmatprep.subr.bf16.mxu0 0
      %359 = vmatpush1.bf16.msra.mxu0 %v336
      %360 = vmatprep.subr.bf16.mxu0 0
      %361 = vmatpush1.bf16.msra.mxu0 %v335
      %362 = vmatprep.subr.bf16.mxu0 0
      %363 = vmatpush2.bf16.msra.mxu0 0
      %364 = vmatprep.subr.bf16.mxu0 0
      %365 = vmatpush2.bf16.msra.mxu0 0
      %366 = vmatprep.subr.bf16.mxu0 0
      %367 = vmatpush2.bf16.msra.mxu0 0
      %368 = vmatprep.subr.bf16.mxu0 0
      %369 = vmatpush2.bf16.msra.mxu0 0
      %370 = vmatprep.subr.bf16.mxu0 0
      %371 = vmatpush2.bf16.msra.mxu0 0
      %372 = vmatprep.subr.bf16.mxu0 0
      %373 = vmatpush2.bf16.msra.mxu0 0
      %374 = vmatprep.subr.bf16.mxu0 0
      %375 = vmatpush2.bf16.msra.mxu0 0
      %376 = vmatprep.subr.bf16.mxu0 0
      %377 = vmatpush2.bf16.msra.mxu0 0
      %378 = vmatprep.mubr.bf16.mxu0 0
      %379 = vmatmul.mubr.bf16.gmra.mxu0 %v341
      %v380 = vpop.f32.mrf.mxu0
      %v381 = vadd.f32 0.0, %v380
      %v382 = vpop.f32.mrf.mxu0
      %v383 = vpop.f32.mrf.mxu0
      %v384 = vadd.f32 0.0, %v383
      %v385 = vpop.f32.mrf.mxu0
      %386 = vmatprep.mubr.bf16.mxu0 0
      %387 = vmatmul.mubr.bf16.gmra.mxu0 %v344
      %v388 = vpop.f32.mrf.mxu0
      %v389 = vadd.f32 0.0, %v388
      %v390 = vpop.f32.mrf.mxu0
      %v391 = vpop.f32.mrf.mxu0
      %v392 = vpop.f32.mrf.mxu0
      %393 = vdwg.mxu0
      %v394 = vpack.c.b16 %v307, %v307
      %v399 = vunpack.c.l.b16 %v292
      %v400 = vunpack.c.l.b16 %v293
      %v401 = vunpack.c.l.b16 %v294
      %v402 = vunpack.c.l.b16 %v295
      %v403 = vpack.c.b16 %v400, %v399
      %v404 = vpack.c.b16 %v402, %v401
      %v407 = vsel %vm339, %v309, 0
      %v410 = vsel %vm339, %v394, 0
      %412 = vmatprep.subr.bf16.mxu0 0
      %413 = vmatpush1.bf16.msra.mxu0 0
      %414 = vmatprep.subr.bf16.mxu0 0
      %415 = vmatpush1.bf16.msra.mxu0 0
      %416 = vmatprep.subr.bf16.mxu0 0
      %417 = vmatpush1.bf16.msra.mxu0 0
      %418 = vmatprep.subr.bf16.mxu0 0
      %419 = vmatpush1.bf16.msra.mxu0 0
      %420 = vmatprep.subr.bf16.mxu0 0
      %421 = vmatpush1.bf16.msra.mxu0 0
      %422 = vmatprep.subr.bf16.mxu0 0
      %423 = vmatpush1.bf16.msra.mxu0 0
      %424 = vmatprep.subr.bf16.mxu0 0
      %425 = vmatpush1.bf16.msra.mxu0 %v404
      %426 = vmatprep.subr.bf16.mxu0 0
      %427 = vmatpush1.bf16.msra.mxu0 %v403
      %428 = vmatprep.subr.bf16.mxu0 0
      %429 = vmatpush2.bf16.msra.mxu0 0
      %430 = vmatprep.subr.bf16.mxu0 0
      %431 = vmatpush2.bf16.msra.mxu0 0
      %432 = vmatprep.subr.bf16.mxu0 0
      %433 = vmatpush2.bf16.msra.mxu0 0
      %434 = vmatprep.subr.bf16.mxu0 0
      %435 = vmatpush2.bf16.msra.mxu0 0
      %436 = vmatprep.subr.bf16.mxu0 0
      %437 = vmatpush2.bf16.msra.mxu0 0
      %438 = vmatprep.subr.bf16.mxu0 0
      %439 = vmatpush2.bf16.msra.mxu0 0
      %440 = vmatprep.subr.bf16.mxu0 0
      %441 = vmatpush2.bf16.msra.mxu0 0
      %442 = vmatprep.subr.bf16.mxu0 0
      %443 = vmatpush2.bf16.msra.mxu0 0
      %444 = vmatprep.mubr.bf16.mxu0 0
      %445 = vmatmul.mubr.bf16.gmra.mxu0 %v407
      %v446 = vpop.f32.mrf.mxu0
      %v447 = vadd.f32 %v381, %v446
      %v448 = vpop.f32.mrf.mxu0
      %v449 = vpop.f32.mrf.mxu0
      %v450 = vadd.f32 %v384, %v449
      %v451 = vpop.f32.mrf.mxu0
      %452 = vmatprep.mubr.bf16.mxu0 0
      %453 = vmatmul.mubr.bf16.gmra.mxu0 %v410
      %v454 = vpop.f32.mrf.mxu0
      %v455 = vadd.f32 %v389, %v454
      %v456 = vpop.f32.mrf.mxu0
      %v457 = vpop.f32.mrf.mxu0
      %v458 = vpop.f32.mrf.mxu0
      %459 = vdwg.mxu0
      %v460 = vld [vmem:[%s278] sm:$0xe]
      %v461 = vld [vmem:[%s1 + $0x20] sm:$0xf]
      %v462 = vld [vmem:[%s1 + $0x24] sm:$0xf]
      %v463 = vld [vmem:[%s1 + $0x28] sm:$0xf]
      %v464 = vld [vmem:[%s1 + $0x2c] sm:$0xf]
      %v466 = vunpack.c.l.b16 %v460
      %v467 = vpack.c.b16 %v306, %v466
      %vm468 = vcmask 1046528
      %v469 = vrot.slane %v467, 1
      %v470 = vrot.slane %v310, 1
      %v471 = vsel %vm468, %v469, %v470
      %v476 = vunpack.c.l.b16 %v461
      %v477 = vunpack.c.l.b16 %v462
      %v478 = vunpack.c.l.b16 %v463
      %v479 = vunpack.c.l.b16 %v464
      %v480 = vpack.c.b16 %v477, %v476
      %v481 = vpack.c.b16 %v479, %v478
      %v485 = vsel %vm339, %v471, 0
      %v488 = vsel %vm339, %v470, 0
      %490 = vmatprep.subr.bf16.mxu0 0
      %491 = vmatpush1.bf16.msra.mxu0 0
      %492 = vmatprep.subr.bf16.mxu0 0
      %493 = vmatpush1.bf16.msra.mxu0 0
      %494 = vmatprep.subr.bf16.mxu0 0
      %495 = vmatpush1.bf16.msra.mxu0 0
      %496 = vmatprep.subr.bf16.mxu0 0
      %497 = vmatpush1.bf16.msra.mxu0 0
      %498 = vmatprep.subr.bf16.mxu0 0
      %499 = vmatpush1.bf16.msra.mxu0 0
      %500 = vmatprep.subr.bf16.mxu0 0
      %501 = vmatpush1.bf16.msra.mxu0 0
      %502 = vmatprep.subr.bf16.mxu0 0
      %503 = vmatpush1.bf16.msra.mxu0 %v481
      %504 = vmatprep.subr.bf16.mxu0 0
      %505 = vmatpush1.bf16.msra.mxu0 %v480
      %506 = vmatprep.subr.bf16.mxu0 0
      %507 = vmatpush2.bf16.msra.mxu0 0
      %508 = vmatprep.subr.bf16.mxu0 0
      %509 = vmatpush2.bf16.msra.mxu0 0
      %510 = vmatprep.subr.bf16.mxu0 0
      %511 = vmatpush2.bf16.msra.mxu0 0
      %512 = vmatprep.subr.bf16.mxu0 0
      %513 = vmatpush2.bf16.msra.mxu0 0
      %514 = vmatprep.subr.bf16.mxu0 0
      %515 = vmatpush2.bf16.msra.mxu0 0
      %516 = vmatprep.subr.bf16.mxu0 0
      %517 = vmatpush2.bf16.msra.mxu0 0
      %518 = vmatprep.subr.bf16.mxu0 0
      %519 = vmatpush2.bf16.msra.mxu0 0
      %520 = vmatprep.subr.bf16.mxu0 0
      %521 = vmatpush2.bf16.msra.mxu0 0
      %522 = vmatprep.mubr.bf16.mxu0 0
      %523 = vmatmul.mubr.bf16.gmra.mxu0 %v485
      %v524 = vpop.f32.mrf.mxu0
      %v525 = vadd.f32 0.0, %v524
      %v526 = vpop.f32.mrf.mxu0
      %v527 = vpop.f32.mrf.mxu0
      %v528 = vadd.f32 0.0, %v527
      %v529 = vpop.f32.mrf.mxu0
      %530 = vmatprep.mubr.bf16.mxu0 0
      %531 = vmatmul.mubr.bf16.gmra.mxu0 %v488
      %v532 = vpop.f32.mrf.mxu0
      %v533 = vadd.f32 0.0, %v532
      %v534 = vpop.f32.mrf.mxu0
      %v535 = vpop.f32.mrf.mxu0
      %v536 = vpop.f32.mrf.mxu0
      %537 = vdwg.mxu0
      %v538 = vadd.f32 %v447, %v525
      %v539 = vadd.f32 %v450, %v528
      %v540 = vadd.f32 %v455, %v533
      %v541 = vld [vmem:[%s278] sm:$0x8]
      %v542 = vld [vmem:[%s278 + $0xc] sm:$0x7]
      %v543 = vld [vmem:[%s1 + $0x30] sm:$0xf]
      %v544 = vld [vmem:[%s1 + $0x34] sm:$0xf]
      %v545 = vld [vmem:[%s1 + $0x38] sm:$0xf]
      %v546 = vld [vmem:[%s1 + $0x3c] sm:$0xf]
      %v549 = vunpack.c.l.b16 %v541
      %v550 = vunpack.c.l.b16 %v542
      %v551 = vpack.c.b16 %v306, %v549
      %v552 = vpack.c.b16 %v550, %v307
      %vm553 = vcmask 1044480
      %v554 = vrot.slane %v551, 3
      %v555 = vrot.slane %v552, 3
      %v556 = vsel %vm553, %v554, %v555
      %v561 = vunpack.c.l.b16 %v543
      %v562 = vunpack.c.l.b16 %v544
      %v563 = vunpack.c.l.b16 %v545
      %v564 = vunpack.c.l.b16 %v546
      %v565 = vpack.c.b16 %v562, %v561
      %v566 = vpack.c.b16 %v564, %v563
      %v570 = vsel %vm339, %v556, 0
      %v573 = vsel %vm339, %v555, 0
      %575 = vmatprep.subr.bf16.mxu0 0
      %576 = vmatpush1.bf16.msra.mxu0 0
      %577 = vmatprep.subr.bf16.mxu0 0
      %578 = vmatpush1.bf16.msra.mxu0 0
      %579 = vmatprep.subr.bf16.mxu0 0
      %580 = vmatpush1.bf16.msra.mxu0 0
      %581 = vmatprep.subr.bf16.mxu0 0
      %582 = vmatpush1.bf16.msra.mxu0 0
      %583 = vmatprep.subr.bf16.mxu0 0
      %584 = vmatpush1.bf16.msra.mxu0 0
      %585 = vmatprep.subr.bf16.mxu0 0
      %586 = vmatpush1.bf16.msra.mxu0 0
      %587 = vmatprep.subr.bf16.mxu0 0
      %588 = vmatpush1.bf16.msra.mxu0 %v566
      %589 = vmatprep.subr.bf16.mxu0 0
      %590 = vmatpush1.bf16.msra.mxu0 %v565
      %591 = vmatprep.subr.bf16.mxu0 0
      %592 = vmatpush2.bf16.msra.mxu0 0
      %593 = vmatprep.subr.bf16.mxu0 0
      %594 = vmatpush2.bf16.msra.mxu0 0
      %595 = vmatprep.subr.bf16.mxu0 0
      %596 = vmatpush2.bf16.msra.mxu0 0
      %597 = vmatprep.subr.bf16.mxu0 0
      %598 = vmatpush2.bf16.msra.mxu0 0
      %599 = vmatprep.subr.bf16.mxu0 0
      %600 = vmatpush2.bf16.msra.mxu0 0
      %601 = vmatprep.subr.bf16.mxu0 0
      %602 = vmatpush2.bf16.msra.mxu0 0
      %603 = vmatprep.subr.bf16.mxu0 0
      %604 = vmatpush2.bf16.msra.mxu0 0
      %605 = vmatprep.subr.bf16.mxu0 0
      %606 = vmatpush2.bf16.msra.mxu0 0
      %607 = vmatprep.mubr.bf16.mxu0 0
      %608 = vmatmul.mubr.bf16.gmra.mxu0 %v570
      %v609 = vpop.f32.mrf.mxu0
      %v610 = vadd.f32 0.0, %v609
      %v611 = vpop.f32.mrf.mxu0
      %v612 = vpop.f32.mrf.mxu0
      %v613 = vadd.f32 0.0, %v612
      %v614 = vpop.f32.mrf.mxu0
      %615 = vmatprep.mubr.bf16.mxu0 0
      %616 = vmatmul.mubr.bf16.gmra.mxu0 %v573
      %v617 = vpop.f32.mrf.mxu0
      %v618 = vadd.f32 0.0, %v617
      %v619 = vpop.f32.mrf.mxu0
      %v620 = vpop.f32.mrf.mxu0
      %v621 = vpop.f32.mrf.mxu0
      %622 = vdwg.mxu0
      %v623 = vadd.f32 %v538, %v610
      %v624 = vadd.f32 %v539, %v613
      %v625 = vadd.f32 %v540, %v618
      %v626 = vld [vmem:[%s278 + $0xc] sm:$0xf]
      %v627 = vld [vmem:[%s1 + $0x40] sm:$0xf]
      %v628 = vld [vmem:[%s1 + $0x44] sm:$0xf]
      %v629 = vld [vmem:[%s1 + $0x48] sm:$0xf]
      %v630 = vld [vmem:[%s1 + $0x4c] sm:$0xf]
      %v632 = vunpack.c.l.b16 %v626
      %v633 = vpack.c.b16 %v632, %v307
      %vm634 = vsmask.f32 4352
      %v636 = vshrl.u32 %v551, 16
      %v638 = vrot.slane %v636, 3
      %v639 = vshll.u32 %v551, 16
      %v641 = vrot.slane %v639, 4
      %v642 = vor.u32 %v638, %v641
      %v644 = vshrl.u32 %v633, 16
      %v646 = vrot.slane %v644, 3
      %v647 = vshll.u32 %v633, 16
      %v649 = vrot.slane %v647, 4
      %v650 = vor.u32 %v646, %v649
      %v651 = vsel %vm634, %v642, %v650
      %v656 = vunpack.c.l.b16 %v627
      %v657 = vunpack.c.l.b16 %v628
      %v658 = vunpack.c.l.b16 %v629
      %v659 = vunpack.c.l.b16 %v630
      %v660 = vpack.c.b16 %v657, %v656
      %v661 = vpack.c.b16 %v659, %v658
      %v665 = vsel %vm339, %v651, 0
      %v668 = vsel %vm339, %v650, 0
      %670 = vmatprep.subr.bf16.mxu0 0
      %671 = vmatpush1.bf16.msra.mxu0 0
      %672 = vmatprep.subr.bf16.mxu0 0
      %673 = vmatpush1.bf16.msra.mxu0 0
      %674 = vmatprep.subr.bf16.mxu0 0
      %675 = vmatpush1.bf16.msra.mxu0 0
      %676 = vmatprep.subr.bf16.mxu0 0
      %677 = vmatpush1.bf16.msra.mxu0 0
      %678 = vmatprep.subr.bf16.mxu0 0
      %679 = vmatpush1.bf16.msra.mxu0 0
      %680 = vmatprep.subr.bf16.mxu0 0
      %681 = vmatpush1.bf16.msra.mxu0 0
      %682 = vmatprep.subr.bf16.mxu0 0
      %683 = vmatpush1.bf16.msra.mxu0 %v661
      %684 = vmatprep.subr.bf16.mxu0 0
      %685 = vmatpush1.bf16.msra.mxu0 %v660
      %686 = vmatprep.subr.bf16.mxu0 0
      %687 = vmatpush2.bf16.msra.mxu0 0
      %688 = vmatprep.subr.bf16.mxu0 0
      %689 = vmatpush2.bf16.msra.mxu0 0
      %690 = vmatprep.subr.bf16.mxu0 0
      %691 = vmatpush2.bf16.msra.mxu0 0
      %692 = vmatprep.subr.bf16.mxu0 0
      %693 = vmatpush2.bf16.msra.mxu0 0
      %694 = vmatprep.subr.bf16.mxu0 0
      %695 = vmatpush2.bf16.msra.mxu0 0
      %696 = vmatprep.subr.bf16.mxu0 0
      %697 = vmatpush2.bf16.msra.mxu0 0
      %698 = vmatprep.subr.bf16.mxu0 0
      %699 = vmatpush2.bf16.msra.mxu0 0
      %700 = vmatprep.subr.bf16.mxu0 0
      %701 = vmatpush2.bf16.msra.mxu0 0
      %702 = vmatprep.mubr.bf16.mxu0 0
      %703 = vmatmul.mubr.bf16.gmra.mxu0 %v665
      %v704 = vpop.f32.mrf.mxu0
      %v705 = vadd.f32 0.0, %v704
      %v706 = vpop.f32.mrf.mxu0
      %v707 = vpop.f32.mrf.mxu0
      %v708 = vadd.f32 0.0, %v707
      %v709 = vpop.f32.mrf.mxu0
      %710 = vmatprep.mubr.bf16.mxu0 0
      %711 = vmatmul.mubr.bf16.gmra.mxu0 %v668
      %v712 = vpop.f32.mrf.mxu0
      %v713 = vadd.f32 0.0, %v712
      %v714 = vpop.f32.mrf.mxu0
      %v715 = vpop.f32.mrf.mxu0
      %v716 = vpop.f32.mrf.mxu0
      %717 = vdwg.mxu0
      %v718 = vadd.f32 %v623, %v705
      %v719 = vadd.f32 %v624, %v708
      %v720 = vadd.f32 %v625, %v713
      %v721 = vld [vmem:[%s1 + $0x50] sm:$0xf]
      %v722 = vld [vmem:[%s1 + $0x54] sm:$0xf]
      %v723 = vld [vmem:[%s1 + $0x58] sm:$0xf]
      %v724 = vld [vmem:[%s1 + $0x5c] sm:$0xf]
      %v725 = vpack.c.b16 %v307, %v306
      %v726 = vpack.c.b16 %v632, %v632
      %v731 = vunpack.c.l.b16 %v721
      %v732 = vunpack.c.l.b16 %v722
      %v733 = vunpack.c.l.b16 %v723
      %v734 = vunpack.c.l.b16 %v724
      %v735 = vpack.c.b16 %v732, %v731
      %v736 = vpack.c.b16 %v734, %v733
      %v740 = vsel %vm339, %v725, 0
      %v743 = vsel %vm339, %v726, 0
      %745 = vmatprep.subr.bf16.mxu0 0
      %746 = vmatpush1.bf16.msra.mxu0 0
      %747 = vmatprep.subr.bf16.mxu0 0
      %748 = vmatpush1.bf16.msra.mxu0 0
      %749 = vmatprep.subr.bf16.mxu0 0
      %750 = vmatpush1.bf16.msra.mxu0 0
      %751 = vmatprep.subr.bf16.mxu0 0
      %752 = vmatpush1.bf16.msra.mxu0 0
      %753 = vmatprep.subr.bf16.mxu0 0
      %754 = vmatpush1.bf16.msra.mxu0 0
      %755 = vmatprep.subr.bf16.mxu0 0
      %756 = vmatpush1.bf16.msra.mxu0 0
      %757 = vmatprep.subr.bf16.mxu0 0
      %758 = vmatpush1.bf16.msra.mxu0 %v736
      %759 = vmatprep.subr.bf16.mxu0 0
      %760 = vmatpush1.bf16.msra.mxu0 %v735
      %761 = vmatprep.subr.bf16.mxu0 0
      %762 = vmatpush2.bf16.msra.mxu0 0
      %763 = vmatprep.subr.bf16.mxu0 0
      %764 = vmatpush2.bf16.msra.mxu0 0
      %765 = vmatprep.subr.bf16.mxu0 0
      %766 = vmatpush2.bf16.msra.mxu0 0
      %767 = vmatprep.subr.bf16.mxu0 0
      %768 = vmatpush2.bf16.msra.mxu0 0
      %769 = vmatprep.subr.bf16.mxu0 0
      %770 = vmatpush2.bf16.msra.mxu0 0
      %771 = vmatprep.subr.bf16.mxu0 0
      %772 = vmatpush2.bf16.msra.mxu0 0
      %773 = vmatprep.subr.bf16.mxu0 0
      %774 = vmatpush2.bf16.msra.mxu0 0
      %775 = vmatprep.subr.bf16.mxu0 0
      %776 = vmatpush2.bf16.msra.mxu0 0
      %777 = vmatprep.mubr.bf16.mxu0 0
      %778 = vmatmul.mubr.bf16.gmra.mxu0 %v740
      %v779 = vpop.f32.mrf.mxu0
      %v780 = vadd.f32 0.0, %v779
      %v781 = vpop.f32.mrf.mxu0
      %v782 = vpop.f32.mrf.mxu0
      %v783 = vadd.f32 0.0, %v782
      %v784 = vpop.f32.mrf.mxu0
      %785 = vmatprep.mubr.bf16.mxu0 0
      %786 = vmatmul.mubr.bf16.gmra.mxu0 %v743
      %v787 = vpop.f32.mrf.mxu0
      %v788 = vadd.f32 0.0, %v787
      %v789 = vpop.f32.mrf.mxu0
      %v790 = vpop.f32.mrf.mxu0
      %v791 = vpop.f32.mrf.mxu0
      %792 = vdwg.mxu0
      %v793 = vadd.f32 %v718, %v780
      %v794 = vadd.f32 %v719, %v783
      %v795 = vadd.f32 %v720, %v788
      %v796 = vld [vmem:[%s278 + $0x4] sm:$0xc]
      %v797 = vld [vmem:[%s278 + $0x8] sm:$0xf]
      %v798 = vld [vmem:[%s278 + $0xc] sm:$0xf]
      %v799 = vld [vmem:[%s278 + $0x10] sm:$0x3]
      %v800 = vld [vmem:[%s1 + $0x60] sm:$0xf]
      %v801 = vld [vmem:[%s1 + $0x64] sm:$0xf]
      %v802 = vld [vmem:[%s1 + $0x68] sm:$0xf]
      %v803 = vld [vmem:[%s1 + $0x6c] sm:$0xf]
      %v808 = vunpack.c.l.b16 %v796
      %v809 = vunpack.c.l.b16 %v797
      %v810 = vunpack.c.l.b16 %v798
      %v811 = vunpack.c.l.b16 %v799
      %v812 = vpack.c.b16 %v809, %v808
      %v813 = vpack.c.b16 %v811, %v810
      %vm814 = vcmask 1045504
      %v815 = vrot.slane %v812, 2
      %v816 = vrot.slane %v813, 2
      %v817 = vsel %vm814, %v815, %v816
      %v822 = vunpack.c.l.b16 %v800
      %v823 = vunpack.c.l.b16 %v801
      %v824 = vunpack.c.l.b16 %v802
      %v825 = vunpack.c.l.b16 %v803
      %v826 = vpack.c.b16 %v823, %v822
      %v827 = vpack.c.b16 %v825, %v824
      %v831 = vsel %vm339, %v817, 0
      %v834 = vsel %vm339, %v816, 0
      %836 = vmatprep.subr.bf16.mxu0 0
      %837 = vmatpush1.bf16.msra.mxu0 0
      %838 = vmatprep.subr.bf16.mxu0 0
      %839 = vmatpush1.bf16.msra.mxu0 0
      %840 = vmatprep.subr.bf16.mxu0 0
      %841 = vmatpush1.bf16.msra.mxu0 0
      %842 = vmatprep.subr.bf16.mxu0 0
      %843 = vmatpush1.bf16.msra.mxu0 0
      %844 = vmatprep.subr.bf16.mxu0 0
      %845 = vmatpush1.bf16.msra.mxu0 0
      %846 = vmatprep.subr.bf16.mxu0 0
      %847 = vmatpush1.bf16.msra.mxu0 0
      %848 = vmatprep.subr.bf16.mxu0 0
      %849 = vmatpush1.bf16.msra.mxu0 %v827
      %850 = vmatprep.subr.bf16.mxu0 0
      %851 = vmatpush1.bf16.msra.mxu0 %v826
      %852 = vmatprep.subr.bf16.mxu0 0
      %853 = vmatpush2.bf16.msra.mxu0 0
      %854 = vmatprep.subr.bf16.mxu0 0
      %855 = vmatpush2.bf16.msra.mxu0 0
      %856 = vmatprep.subr.bf16.mxu0 0
      %857 = vmatpush2.bf16.msra.mxu0 0
      %858 = vmatprep.subr.bf16.mxu0 0
      %859 = vmatpush2.bf16.msra.mxu0 0
      %860 = vmatprep.subr.bf16.mxu0 0
      %861 = vmatpush2.bf16.msra.mxu0 0
      %862 = vmatprep.subr.bf16.mxu0 0
      %863 = vmatpush2.bf16.msra.mxu0 0
      %864 = vmatprep.subr.bf16.mxu0 0
      %865 = vmatpush2.bf16.msra.mxu0 0
      %866 = vmatprep.subr.bf16.mxu0 0
      %867 = vmatpush2.bf16.msra.mxu0 0
      %868 = vmatprep.mubr.bf16.mxu0 0
      %869 = vmatmul.mubr.bf16.gmra.mxu0 %v831
      %v870 = vpop.f32.mrf.mxu0
      %v871 = vadd.f32 0.0, %v870
      %v872 = vpop.f32.mrf.mxu0
      %v873 = vpop.f32.mrf.mxu0
      %v874 = vadd.f32 0.0, %v873
      %v875 = vpop.f32.mrf.mxu0
      %876 = vmatprep.mubr.bf16.mxu0 0
      %877 = vmatmul.mubr.bf16.gmra.mxu0 %v834
      %v878 = vpop.f32.mrf.mxu0
      %v879 = vadd.f32 0.0, %v878
      %v880 = vpop.f32.mrf.mxu0
      %v881 = vpop.f32.mrf.mxu0
      %v882 = vpop.f32.mrf.mxu0
      %883 = vdwg.mxu0
      %v884 = vadd.f32 %v793, %v871
      %v885 = vadd.f32 %v794, %v874
      %v886 = vadd.f32 %v795, %v879
      %v887 = vld [vmem:[%s278 + $0x10] sm:$0x7]
      %v888 = vld [vmem:[%s1 + $0x70] sm:$0xf]
      %v889 = vld [vmem:[%s1 + $0x74] sm:$0xf]
      %v890 = vld [vmem:[%s1 + $0x78] sm:$0xf]
      %v891 = vld [vmem:[%s1 + $0x7c] sm:$0xf]
      %v893 = vunpack.c.l.b16 %v887
      %v894 = vpack.c.b16 %v893, %v810
      %vm895 = vsmask.f32 5376
      %v897 = vshrl.u32 %v812, 16
      %v899 = vrot.slane %v897, 2
      %v900 = vshll.u32 %v812, 16
      %v902 = vrot.slane %v900, 3
      %v903 = vor.u32 %v899, %v902
      %v905 = vshrl.u32 %v894, 16
      %v907 = vrot.slane %v905, 2
      %v908 = vshll.u32 %v894, 16
      %v910 = vrot.slane %v908, 3
      %v911 = vor.u32 %v907, %v910
      %v912 = vsel %vm895, %v903, %v911
      %v917 = vunpack.c.l.b16 %v888
      %v918 = vunpack.c.l.b16 %v889
      %v919 = vunpack.c.l.b16 %v890
      %v920 = vunpack.c.l.b16 %v891
      %v921 = vpack.c.b16 %v918, %v917
      %v922 = vpack.c.b16 %v920, %v919
      %v926 = vsel %vm339, %v912, 0
      %v929 = vsel %vm339, %v911, 0
      %931 = vmatprep.subr.bf16.mxu0 0
      %932 = vmatpush1.bf16.msra.mxu0 0
      %933 = vmatprep.subr.bf16.mxu0 0
      %934 = vmatpush1.bf16.msra.mxu0 0
      %935 = vmatprep.subr.bf16.mxu0 0
      %936 = vmatpush1.bf16.msra.mxu0 0
      %937 = vmatprep.subr.bf16.mxu0 0
      %938 = vmatpush1.bf16.msra.mxu0 0
      %939 = vmatprep.subr.bf16.mxu0 0
      %940 = vmatpush1.bf16.msra.mxu0 0
      %941 = vmatprep.subr.bf16.mxu0 0
      %942 = vmatpush1.bf16.msra.mxu0 0
      %943 = vmatprep.subr.bf16.mxu0 0
      %944 = vmatpush1.bf16.msra.mxu0 %v922
      %945 = vmatprep.subr.bf16.mxu0 0
      %946 = vmatpush1.bf16.msra.mxu0 %v921
      %947 = vmatprep.subr.bf16.mxu0 0
      %948 = vmatpush2.bf16.msra.mxu0 0
      %949 = vmatprep.subr.bf16.mxu0 0
      %950 = vmatpush2.bf16.msra.mxu0 0
      %951 = vmatprep.subr.bf16.mxu0 0
      %952 = vmatpush2.bf16.msra.mxu0 0
      %953 = vmatprep.subr.bf16.mxu0 0
      %954 = vmatpush2.bf16.msra.mxu0 0
      %955 = vmatprep.subr.bf16.mxu0 0
      %956 = vmatpush2.bf16.msra.mxu0 0
      %957 = vmatprep.subr.bf16.mxu0 0
      %958 = vmatpush2.bf16.msra.mxu0 0
      %959 = vmatprep.subr.bf16.mxu0 0
      %960 = vmatpush2.bf16.msra.mxu0 0
      %961 = vmatprep.subr.bf16.mxu0 0
      %962 = vmatpush2.bf16.msra.mxu0 0
      %963 = vmatprep.mubr.bf16.mxu0 0
      %964 = vmatmul.mubr.bf16.gmra.mxu0 %v926
      %v965 = vpop.f32.mrf.mxu0
      %v966 = vadd.f32 0.0, %v965
      %v967 = vpop.f32.mrf.mxu0
      %v968 = vpop.f32.mrf.mxu0
      %v969 = vadd.f32 0.0, %v968
      %v970 = vpop.f32.mrf.mxu0
      %971 = vmatprep.mubr.bf16.mxu0 0
      %972 = vmatmul.mubr.bf16.gmra.mxu0 %v929
      %v973 = vpop.f32.mrf.mxu0
      %v974 = vadd.f32 0.0, %v973
      %v975 = vpop.f32.mrf.mxu0
      %v976 = vpop.f32.mrf.mxu0
      %v977 = vpop.f32.mrf.mxu0
      %978 = vdwg.mxu0
      %v979 = vadd.f32 %v884, %v966
      %v980 = vadd.f32 %v885, %v969
      %v981 = vadd.f32 %v886, %v974
      %v982 = vld [vmem:[%s278 + $0x4] sm:$0x8]
      %v983 = vld [vmem:[%s1 + $0x80] sm:$0xf]
      %v984 = vld [vmem:[%s1 + $0x84] sm:$0xf]
      %v985 = vld [vmem:[%s1 + $0x88] sm:$0xf]
      %v986 = vld [vmem:[%s1 + $0x8c] sm:$0xf]
      %v988 = vunpack.c.l.b16 %v982
      %v989 = vpack.c.b16 %v809, %v988
      %v990 = vrot.slane %v989, 3
      %v991 = vrot.slane %v894, 3
      %v992 = vsel %vm553, %v990, %v991
      %v997 = vunpack.c.l.b16 %v983
      %v998 = vunpack.c.l.b16 %v984
      %v999 = vunpack.c.l.b16 %v985
      %v1000 = vunpack.c.l.b16 %v986
      %v1001 = vpack.c.b16 %v998, %v997
      %v1002 = vpack.c.b16 %v1000, %v999
      %v1006 = vsel %vm339, %v992, 0
      %v1009 = vsel %vm339, %v991, 0
      %1011 = vmatprep.subr.bf16.mxu0 0
      %1012 = vmatpush1.bf16.msra.mxu0 0
      %1013 = vmatprep.subr.bf16.mxu0 0
      %1014 = vmatpush1.bf16.msra.mxu0 0
      %1015 = vmatprep.subr.bf16.mxu0 0
      %1016 = vmatpush1.bf16.msra.mxu0 0
      %1017 = vmatprep.subr.bf16.mxu0 0
      %1018 = vmatpush1.bf16.msra.mxu0 0
      %1019 = vmatprep.subr.bf16.mxu0 0
      %1020 = vmatpush1.bf16.msra.mxu0 0
      %1021 = vmatprep.subr.bf16.mxu0 0
      %1022 = vmatpush1.bf16.msra.mxu0 0
      %1023 = vmatprep.subr.bf16.mxu0 0
      %1024 = vmatpush1.bf16.msra.mxu0 %v1002
      %1025 = vmatprep.subr.bf16.mxu0 0
      %1026 = vmatpush1.bf16.msra.mxu0 %v1001
      %1027 = vmatprep.subr.bf16.mxu0 0
      %1028 = vmatpush2.bf16.msra.mxu0 0
      %1029 = vmatprep.subr.bf16.mxu0 0
      %1030 = vmatpush2.bf16.msra.mxu0 0
      %1031 = vmatprep.subr.bf16.mxu0 0
      %1032 = vmatpush2.bf16.msra.mxu0 0
      %1033 = vmatprep.subr.bf16.mxu0 0
      %1034 = vmatpush2.bf16.msra.mxu0 0
      %1035 = vmatprep.subr.bf16.mxu0 0
      %1036 = vmatpush2.bf16.msra.mxu0 0
      %1037 = vmatprep.subr.bf16.mxu0 0
      %1038 = vmatpush2.bf16.msra.mxu0 0
      %1039 = vmatprep.subr.bf16.mxu0 0
      %1040 = vmatpush2.bf16.msra.mxu0 0
      %1041 = vmatprep.subr.bf16.mxu0 0
      %1042 = vmatpush2.bf16.msra.mxu0 0
      %1043 = vmatprep.mubr.bf16.mxu0 0
      %1044 = vmatmul.mubr.bf16.gmra.mxu0 %v1006
      %v1045 = vpop.f32.mrf.mxu0
      %v1046 = vadd.f32 0.0, %v1045
      %v1047 = vpop.f32.mrf.mxu0
      %v1048 = vpop.f32.mrf.mxu0
      %v1049 = vadd.f32 0.0, %v1048
      %v1050 = vpop.f32.mrf.mxu0
      %1051 = vmatprep.mubr.bf16.mxu0 0
      %1052 = vmatmul.mubr.bf16.gmra.mxu0 %v1009
      %v1053 = vpop.f32.mrf.mxu0
      %v1054 = vadd.f32 0.0, %v1053
      %v1055 = vpop.f32.mrf.mxu0
      %v1056 = vpop.f32.mrf.mxu0
      %v1057 = vpop.f32.mrf.mxu0
      %1058 = vdwg.mxu0
      %v1059 = vadd.f32 %v979, %v1046
      %v1060 = vadd.f32 %v980, %v1049
      %v1061 = vadd.f32 %v981, %v1054
      %v1062 = vld [vmem:[%s2] sm:$0x1]
      %v1064 = vlaneseq
      %v1065 = vshrl.u32 %v1064, 7
      %v1066 = vsub.s32 0, %v1065
      %v1067 = vrot.slane %v1062, %v1066
      %v1069 = vadd.f32 %v1059, %v1067
      %v1070 = vadd.f32 %v1060, %v1067
      %v1071 = vadd.f32 %v1061, %v1067
      %v1072 = vmax.f32 %v1069, 0.0
      %v1073 = vmax.f32 %v1070, 0.0
      %v1074 = vmax.f32 %v1071, 0.0
      %v1075 = vpack.c.bf16 %v1073, %v1072
      %v1076 = vpack.c.bf16 %v1074, %v1074
      %v1077 = vld [vmem:[%s3] sm:$0xf]
      %v1078 = vld [vmem:[%s3 + $0x4] sm:$0xf]
      %v1079 = vld [vmem:[%s3 + $0x8] sm:$0xf]
      %v1080 = vld [vmem:[%s3 + $0xc] sm:$0xf]
      %v1081 = vld [vmem:[%s3 + $0x10] sm:$0xf]
      %v1082 = vld [vmem:[%s3 + $0x14] sm:$0xf]
      %v1083 = vld [vmem:[%s3 + $0x18] sm:$0xf]
      %v1084 = vld [vmem:[%s3 + $0x1c] sm:$0xf]
      %v1085 = vld [vmem:[%s3 + $0x20] sm:$0xf]
      %v1086 = vld [vmem:[%s3 + $0x24] sm:$0xf]
      %v1087 = vld [vmem:[%s3 + $0x28] sm:$0xf]
      %v1088 = vld [vmem:[%s3 + $0x2c] sm:$0xf]
      %v1089 = vld [vmem:[%s4] sm:$0x1]
      %v1091 = vlaneseq
      %v1092 = vshrl.u32 %v1091, 7
      %v1093 = vsub.s32 0, %v1092
      %v1094 = vrot.slane %v1089, %v1093
      %v1108 = vunpack.c.l.b16 %v1077
      %v1109 = vunpack.c.l.b16 %v1078
      %v1110 = vunpack.c.l.b16 %v1079
      %v1111 = vunpack.c.l.b16 %v1080
      %v1112 = vunpack.c.l.b16 %v1081
      %v1113 = vunpack.c.l.b16 %v1082
      %v1114 = vunpack.c.l.b16 %v1083
      %v1115 = vunpack.c.l.b16 %v1084
      %v1116 = vunpack.c.l.b16 %v1085
      %v1117 = vunpack.c.l.b16 %v1086
      %v1118 = vunpack.c.l.b16 %v1087
      %v1119 = vunpack.c.l.b16 %v1088
      %v1120 = vpack.c.b16 %v1109, %v1108
      %v1121 = vpack.c.b16 %v1111, %v1110
      %v1122 = vpack.c.b16 %v1113, %v1112
      %v1123 = vpack.c.b16 %v1115, %v1114
      %v1124 = vpack.c.b16 %v1117, %v1116
      %v1125 = vpack.c.b16 %v1119, %v1118
      %vm1132 = vcmask 785408
      %v1134 = vsel %vm1132, %v1075, 0
      %v1137 = vsel %vm1132, %v1076, 0
      %1139 = vmatprep.subr.bf16.mxu0 0
      %1140 = vmatpush1.bf16.msra.mxu0 0
      %1141 = vmatprep.subr.bf16.mxu0 0
      %1142 = vmatpush1.bf16.msra.mxu0 0
      %1143 = vmatprep.subr.bf16.mxu0 0
      %1144 = vmatpush1.bf16.msra.mxu0 %v1125
      %1145 = vmatprep.subr.bf16.mxu0 0
      %1146 = vmatpush1.bf16.msra.mxu0 %v1124
      %1147 = vmatprep.subr.bf16.mxu0 0
      %1148 = vmatpush1.bf16.msra.mxu0 %v1123
      %1149 = vmatprep.subr.bf16.mxu0 0
      %1150 = vmatpush1.bf16.msra.mxu0 %v1122
      %1151 = vmatprep.subr.bf16.mxu0 0
      %1152 = vmatpush1.bf16.msra.mxu0 %v1121
      %1153 = vmatprep.subr.bf16.mxu0 0
      %1154 = vmatpush1.bf16.msra.mxu0 %v1120
      %1155 = vmatprep.subr.bf16.mxu0 0
      %1156 = vmatpush2.bf16.msra.mxu0 0
      %1157 = vmatprep.subr.bf16.mxu0 0
      %1158 = vmatpush2.bf16.msra.mxu0 0
      %1159 = vmatprep.subr.bf16.mxu0 0
      %1160 = vmatpush2.bf16.msra.mxu0 0
      %1161 = vmatprep.subr.bf16.mxu0 0
      %1162 = vmatpush2.bf16.msra.mxu0 0
      %1163 = vmatprep.subr.bf16.mxu0 0
      %1164 = vmatpush2.bf16.msra.mxu0 0
      %1165 = vmatprep.subr.bf16.mxu0 0
      %1166 = vmatpush2.bf16.msra.mxu0 0
      %1167 = vmatprep.subr.bf16.mxu0 0
      %1168 = vmatpush2.bf16.msra.mxu0 0
      %1169 = vmatprep.subr.bf16.mxu0 0
      %1170 = vmatpush2.bf16.msra.mxu0 0
      %1171 = vmatprep.mubr.bf16.mxu0 0
      %1172 = vmatmul.mubr.bf16.gmra.mxu0 %v1134
      %v1173 = vpop.f32.mrf.mxu0
      %v1174 = vadd.f32 %v1094, %v1173
      %v1175 = vpop.f32.mrf.mxu0
      %v1176 = vpop.f32.mrf.mxu0
      %v1177 = vadd.f32 %v1094, %v1176
      %v1178 = vpop.f32.mrf.mxu0
      %1179 = vmatprep.mubr.bf16.mxu0 0
      %1180 = vmatmul.mubr.bf16.gmra.mxu0 %v1137
      %v1181 = vpop.f32.mrf.mxu0
      %v1182 = vadd.f32 %v1094, %v1181
      %v1183 = vpop.f32.mrf.mxu0
      %v1184 = vpop.f32.mrf.mxu0
      %v1185 = vpop.f32.mrf.mxu0
      %1186 = vdwg.mxu0
      %v1187 = vlaneseq
      %v1188 = vand.u32 %v1187, 127
      %vm1189 = vcmp.lt.s32.totalorder %v1188, 4
      %v1190 = vsub.f32 0.0, %v1174
      %v1191 = vsub.f32 0.0, %v1177
      %v1192 = vsub.f32 0.0, %v1182
      %v1193 = vmul.f32 %v1190, 1.442695
      %v1194 = vpow.pop %v1193
      %v1195 = vmul.f32 %v1191, 1.442695
      %v1196 = vpow.pop %v1195
      %v1197 = vmul.f32 %v1192, 1.442695
      %v1198 = vpow.pop %v1197
      %v1199 = vadd.f32 %v1194, 1.0
      %v1200 = vadd.f32 %v1196, 1.0
      %v1201 = vadd.f32 %v1198, 1.0
      %v1202 = vrcp.pop %v1199
      %v1203 = vmul.f32 1.0, %v1202
      %v1204 = vrcp.pop %v1200
      %v1205 = vmul.f32 1.0, %v1204
      %v1206 = vrcp.pop %v1201
      %v1207 = vmul.f32 1.0, %v1206
      %v1208 = vsel %vm1189, %v1203, %v1174
      %v1209 = vsel %vm1189, %v1205, %v1177
      %v1210 = vsel %vm1189, %v1207, %v1182
      %v1211 = vld [vmem:[%s5] sm:$0xff]
      %v1212 = vld [vmem:[%s5 + $0x8] sm:$0xff]
      %v1213 = vld [vmem:[%s5 + $0x10] sm:$0xff]
      %1215 = vset.pattern.permute.xlu0 0
      %1216 = vperm.xlu0 %1215, %v1211
      %v1217 = vpop.permute.xlu0 %1216
      %1220 = vset.pattern.permute.xlu0 0
      %1221 = vperm.xlu0 %1220, %v1212
      %v1222 = vpop.permute.xlu0 %1221
      %1225 = vset.pattern.permute.xlu0 0
      %1226 = vperm.xlu0 %1225, %v1213
      %v1227 = vpop.permute.xlu0 %1226
      %v1229 = vmul.f32 %v1208, %v1217
      %v1230 = vmul.f32 %v1209, %v1222
      %v1231 = vmul.f32 %v1210, %v1227
      %1232 = vst [vmem:[%s287] sm:$0xff] %v1229
      %1233 = vst [vmem:[%s287 + $0x8] sm:$0xff] %v1230
      %1234 = vst [vmem:[%s287 + $0x10] sm:$0xff] %v1231
      %p1235 = scmp.lt.s32.totalorder %s21, 1
      %s1236 = scalar_select %p1235, %s21, 1
      %p1237 = scmp.lt.s32.totalorder %s22, 0
      %s1238 = scalar_select %p1237, %s22, 0
      %s1239 = smul.addr %s1238, 3
      %s1240 = smul.addr %s1236, 3
      %s1241 = sadd.s32 %s1239, %s1240
      %s1242 = smul.addr %s1241, 8
      %s1243 = scalar_lea.vmem %s6, %s1242
      // Predicated region
      $region45: #{centernet_inference.6} parent=43 // pred_check
        %p1244 = pneg %p182
      $region46: #{centernet_inference.6} parent=43 // pred_check_branch
        %1246 = sbr.rel (%p1244) target = $region48
      $region47: #{centernet_inference.6} parent=43 // pred_region
        _
      $region48: #{centernet_inference.6} parent=43 // pred_fallthru
        _
    $region44: #{centernet_inference.6} parent=5 // pred_fallthru
      _
    %p1247 = scmp.le.s32.totalorder 2, %s12
    // Predicated region
    $region49: #{centernet_inference.6} parent=5 // pred_check
      %p1248 = pneg %p1247
    $region50: #{centernet_inference.6} parent=5 // pred_check_branch
      %1250 = sbr.rel (%p1248) target = $region52
    $region51: #{centernet_inference.6} parent=5 // pred_region
      %s1251 = ssub.s32 %s12, 2
      // Predicated region
      $region53: #{centernet_inference.6} parent=51 // pred_check
        %p1252 = pneg %p188
      $region54: #{centernet_inference.6} parent=51 // pred_check_branch
        %1254 = sbr.rel (%p1252) target = $region56
      $region55: #{centernet_inference.6} parent=51 // pred_region
        %p1255 = scmp.lt.s32.totalorder %s23, 1
        %s1256 = scalar_select %p1255, %s23, 1
        %p1257 = scmp.lt.s32.totalorder %s24, 0
        %s1258 = scalar_select %p1257, %s24, 0
        %s1259 = smul.addr %s1258, 3
        %s1260 = smul.addr %s1256, 3
        %s1261 = sadd.s32 %s1259, %s1260
        %s1262 = smul.addr %s1261, 8
        %s1263 = scalar_lea.vmem %s6, %s1262
      $region56: #{centernet_inference.6} parent=51 // pred_fallthru
        _
    $region52: #{centernet_inference.6} parent=5 // pred_fallthru
      _
  $region6: #{centernet_inference.6} parent=0 // loop_footer
    %s16 = sadd.s32 1, %s12
  $region7: #{centernet_inference.6} parent=0 // loop_footer_branch
    %11 = sbr.rel target = $region3
  $region8: #{centernet_inference.6} parent=0 // loop_exit
    _

</llo_original>
